<compile_context>
chip_gen: v7x
topology: tpu7x:2x2x1
jax: 0.10.0
libtpu: 0.0.40
codegen_flags: <defaults>
</compile_context>

<pallas_src>
import functools

import jax
import jax.numpy as jnp
from jax import lax
from jax.experimental import pallas as pl
from jax.experimental.pallas import tpu as pltpu


def _silu(x):
    return x * jax.nn.sigmoid(x)


def bottleneck_kernel(x_ref, w1_ref, b1_ref, w2_ref, b2_ref, o_ref, *,
                      H, NB, WC_, add):
    """One grid step: a batch block of NB images fused into the matmul M dim.

    x_ref : (NB*H, W*C1)    pixel-major, channel-minor rows (bf16, lane-dense)
    w1_ref: (W*C1, W*C_)    block-diagonal 1x1-conv weight, BN scale folded (bf16)
    b1_ref: (1, W*C_)       folded BN bias, tiled over W (f32)
    w2_ref: (3*W*C_, W*C2)  ky-stacked banded 3x3-conv weight, BN folded (bf16)
    b2_ref: (1, W*C2)       (f32)
    o_ref : (NB*H, W*C2)
    """
    x = x_ref[...]                                         # (M, W*C1) bf16

    # ---- cv1: 1x1 conv as ONE matmul (M = NB*H, K = W*C1), bias + SiLU ----
    y1 = jnp.dot(x, w1_ref[...], preferred_element_type=jnp.float32)
    y1 = _silu(y1 + b1_ref[...])                           # (M, W*C_) f32

    # ---- cv2: 3x3 conv as ONE matmul with K = 3*W*C_ (ky taps stacked) ----
    # ky = 0/2 taps are sublane-shifted copies of y1; the kx taps and the W
    # zero-padding live in the banded weight, the H zero-padding in the zero
    # rows / cross-image masks below.
    M = NB * H
    zrow = jnp.zeros((1, WC_), jnp.float32)
    up = jnp.concatenate([zrow, y1[:M - 1, :]], axis=0)    # up[i] = y1[i-1]
    dn = jnp.concatenate([y1[1:, :], zrow], axis=0)        # dn[i] = y1[i+1]
    if NB > 1:                                             # mask cross-image rows
        rows = lax.broadcasted_iota(jnp.int32, (M, 1), 0)
        up = jnp.where(rows % H == 0, 0.0, up)
        dn = jnp.where(rows % H == H - 1, 0.0, dn)
    patches = jnp.concatenate([up, y1, dn], axis=1)        # (M, 3*W*C_) f32
    y2 = jnp.dot(patches.astype(w2_ref.dtype), w2_ref[...],
                 preferred_element_type=jnp.float32)
    y2 = _silu(y2 + b2_ref[...])                           # (M, W*C2) f32

    if add:
        y2 = y2 + x.astype(jnp.float32)                    # residual (C1 == C2)
    o_ref[...] = y2.astype(o_ref.dtype)                    # lane-dense store


def _fold_params(params, W, w_dtype=jnp.bfloat16):
    """Fold eval-mode BN into the conv weights (in f32), build the lane-dense
    packed weight matrices once, then cast the MXU operands to bf16."""
    w1, s1, b1, w2, s2, b2 = params
    C1, C_ = w1.shape
    C2 = w2.shape[-1]

    w1f = w1 * s1                                           # (C1, C_)
    w2f = w2 * s2.reshape(1, 1, 1, C2)                      # (3, 3, C_, C2)

    # cv1: block-diagonal (W*C1, W*C_) — one w1 block per pixel column.
    eye_w = jnp.eye(W, dtype=jnp.float32)
    w1bd = jnp.einsum("uv,io->uivo", eye_w, w1f).reshape(W * C1, W * C_)

    # cv2: banded (W*C_, W*C2) matrix per ky (dx taps + W zero-pad in the
    # band structure), stacked along K so cv2 is a single matmul.
    cols = jnp.arange(W)
    bands = []
    for ky in range(3):
        band = jnp.zeros((W, C_, W, C2), jnp.float32)
        for kx in range(3):
            dx = kx - 1
            sel = (cols[:, None] == (cols[None, :] + dx)).astype(jnp.float32)
            band = band + jnp.einsum("uv,co->ucvo", sel, w2f[ky, kx])
        bands.append(band.reshape(W * C_, W * C2))
    w2stack = jnp.concatenate(bands, axis=0)                # (3*W*C_, W*C2)

    b1row = jnp.tile(b1.reshape(1, C_), (1, W)).astype(jnp.float32)  # (1, W*C_)
    b2row = jnp.tile(b2.reshape(1, C2), (1, W)).astype(jnp.float32)  # (1, W*C2)
    return w1bd.astype(w_dtype), b1row, w2stack.astype(w_dtype), b2row


def _pallas_bottleneck(x2d, w1bd, b1row, w2stack, b2row, *, N, NB, H, W,
                       C1, C_, C2, add, out_dtype, single_buffer_weights):
    M, WC_, WC1, WC2 = NB * H, W * C_, W * C1, W * C2
    kernel = functools.partial(bottleneck_kernel, H=H, NB=NB, WC_=WC_, add=add)

    def const_spec(shape):
        # Grid-invariant operand: single-buffer it (double buffering only
        # wastes VMEM when the index_map is constant).
        kw = {}
        if single_buffer_weights:
            kw["pipeline_mode"] = pl.Buffered(buffer_count=1)
        return pl.BlockSpec(shape, lambda n: (0,) * len(shape), **kw)

    return pl.pallas_call(
        kernel,
        out_shape=jax.ShapeDtypeStruct((N * H, WC2), out_dtype),
        grid_spec=pltpu.PrefetchScalarGridSpec(
            num_scalar_prefetch=0,
            grid=(N // NB,),
            in_specs=[
                pl.BlockSpec((M, WC1), lambda n: (n, 0)),
                const_spec((WC1, WC_)),
                const_spec((1, WC_)),
                const_spec((3 * WC_, WC2)),
                const_spec((1, WC2)),
            ],
            out_specs=pl.BlockSpec((M, WC2), lambda n: (n, 0)),
        ),
        compiler_params=pltpu.CompilerParams(
            dimension_semantics=("parallel",)),
    )(x2d, w1bd, b1row, w2stack, b2row)


def bottleneck_forward(x_nchw, params, shortcut=True):
    """params = (w1 (C1,C_), s1 (1,C_), b1 (1,C_), w2 (3,3,C_,C2), s2 (1,C2), b2 (1,C2))."""
    w1, _, _, w2, _, _ = params
    N, C1, H, W = x_nchw.shape
    C_ = w1.shape[1]
    C2 = w2.shape[-1]
    add = bool(shortcut and (C1 == C2))
    out_dtype = x_nchw.dtype

    w1bd, b1row, w2stack, b2row = _fold_params(params, W)

    # NCHW -> pixel-major lane-dense rows (N*H, W*C1), bf16 MXU operand.
    # TODO(synk): NCHW<->NHWC transposes stay only because the PyTorch
    # interface is NCHW; an NHWC end-to-end pipeline would drop them.
    x2d = (jnp.transpose(x_nchw, (0, 2, 3, 1))
           .reshape(N * H, W * C1).astype(jnp.bfloat16))

    # Batch-block sizing: ~2 MiB of in+out per grid step amortizes the
    # ~0.35us/step overhead; keep >= 2 grid steps so both v7x TensorCores get
    # work; NB must divide N.
    per_img = H * W * (C1 * 2 + C2 * out_dtype.itemsize)
    NB = max(1, min(N, (2 << 20) // max(per_img, 1)))
    if N >= 2:
        NB = min(NB, N // 2)
    while N % NB:
        NB -= 1

    kwargs = dict(N=N, NB=NB, H=H, W=W, C1=C1, C_=C_, C2=C2, add=add,
                  out_dtype=out_dtype)
    try:
        out2d = _pallas_bottleneck(x2d, w1bd, b1row, w2stack, b2row,
                                   single_buffer_weights=True, **kwargs)
    except Exception:
        # pipeline_mode=pl.Buffered(1) unsupported on this jax version:
        # fall back to default (double-buffered) weight specs.
        out2d = _pallas_bottleneck(x2d, w1bd, b1row, w2stack, b2row,
                                   single_buffer_weights=False, **kwargs)

    out = out2d.reshape(N, H, W, C2)
    return jnp.transpose(out, (0, 3, 1, 2))


def bottleneck_ref(x_nchw, params, shortcut=True):
    """Pure-JAX f32 reference (XLA convs) for correctness checking."""
    w1, s1, b1, w2, s2, b2 = params
    N, C1, H, W = x_nchw.shape
    C_ = w1.shape[1]
    C2 = w2.shape[-1]
    add = bool(shortcut and (C1 == C2))
    x = jnp.transpose(x_nchw, (0, 2, 3, 1))
    dn = ("NHWC", "HWIO", "NHWC")
    y = lax.conv_general_dilated(x, w1.reshape(1, 1, C1, C_), (1, 1), "SAME",
                                 dimension_numbers=dn)
    y = _silu(y * s1 + b1)
    y = lax.conv_general_dilated(y, w2, (1, 1), "SAME", dimension_numbers=dn)
    y = _silu(y * s2 + b2)
    y = x + y if add else y
    return jnp.transpose(y, (0, 3, 1, 2))


def make_params(key, c1, c2, e=0.5, eps=1e-5):
    """Deterministic synthetic params; BN folded to per-channel scale/bias."""
    c_ = int(c2 * e)
    ks = jax.random.split(key, 10)
    w1 = jax.random.normal(ks[0], (c1, c_), jnp.float32) * 0.2
    g1 = jax.random.uniform(ks[1], (c_,), minval=0.5, maxval=1.5)
    be1 = jax.random.normal(ks[2], (c_,)) * 0.1
    m1 = jax.random.normal(ks[3], (c_,)) * 0.1
    v1 = jax.random.uniform(ks[4], (c_,), minval=0.5, maxval=1.5)
    w2 = jax.random.normal(ks[5], (3, 3, c_, c2), jnp.float32) * 0.1
    g2 = jax.random.uniform(ks[6], (c2,), minval=0.5, maxval=1.5)
    be2 = jax.random.normal(ks[7], (c2,)) * 0.1
    m2 = jax.random.normal(ks[8], (c2,)) * 0.1
    v2 = jax.random.uniform(ks[9], (c2,), minval=0.5, maxval=1.5)

    s1 = (g1 / jnp.sqrt(v1 + eps)).reshape(1, c_)
    b1 = (be1 - m1 * g1 / jnp.sqrt(v1 + eps)).reshape(1, c_)
    s2 = (g2 / jnp.sqrt(v2 + eps)).reshape(1, c2)
    b2 = (be2 - m2 * g2 / jnp.sqrt(v2 + eps)).reshape(1, c2)
    return (w1, s1, b1, w2, s2, b2)


if __name__ == "__main__":
    N, C1, C2, H, W = 2, 16, 16, 16, 16   # shortcut active since c1 == c2
    key = jax.random.PRNGKey(0)
    kx, kp = jax.random.split(key)
    x = jax.random.normal(kx, (N, C1, H, W), jnp.float32)
    params = make_params(kp, C1, C2, e=0.5)

    out = jax.block_until_ready(bottleneck_forward(x, params, shortcut=True))
    ref = jax.block_until_ready(bottleneck_ref(x, params, shortcut=True))

    assert out.shape == (N, C2, H, W)
    max_err = float(jnp.max(jnp.abs(out - ref)))
    # bf16 MXU operands (f32 accumulation / bias / SiLU / residual) — the
    # previous 1e-4 f32 tolerance is loosened accordingly.
    assert jnp.allclose(out, ref, atol=5e-2, rtol=5e-2), max_err
    print("KERNEL_OK")
</pallas_src>

<mosaic_0001>
module attributes {stable_mosaic.version = 11 : i64} {
  func.func @bottleneck_kernel(%arg0: i32, %arg1: memref<16x256xbf16, #tpu.memory_space<vmem>>, %arg2: memref<256x128xbf16, #tpu.memory_space<vmem>>, %arg3: memref<1x128xf32, #tpu.memory_space<vmem>>, %arg4: memref<384x256xbf16, #tpu.memory_space<vmem>>, %arg5: memref<1x256xf32, #tpu.memory_space<vmem>>, %arg6: memref<16x256xf32, #tpu.memory_space<vmem>>) attributes {dimension_semantics = [#tpu.dimension_semantics<parallel>], iteration_bounds = array<i64: 2>, scalar_prefetch = 0 : i64, scratch_operands = 0 : i64, tpu.core_type = #tpu.core_type<tc>, window_params = [{transform_indices = @transform_0, window_bounds = array<i64: 16, 256>}, {pipeline_mode = #tpu.pipeline_mode<synchronous>, transform_indices = @transform_1, window_bounds = array<i64: 256, 128>}, {pipeline_mode = #tpu.pipeline_mode<synchronous>, transform_indices = @transform_2, window_bounds = array<i64: 1, 128>}, {pipeline_mode = #tpu.pipeline_mode<synchronous>, transform_indices = @transform_3, window_bounds = array<i64: 384, 256>}, {pipeline_mode = #tpu.pipeline_mode<synchronous>, transform_indices = @transform_4, window_bounds = array<i64: 1, 256>}, {transform_indices = @transform_5, window_bounds = array<i64: 16, 256>}]} {
    %c0 = arith.constant 0 : index
    %c0_0 = arith.constant 0 : index
    %0 = vector.load %arg1[%c0, %c0_0] : memref<16x256xbf16, #tpu.memory_space<vmem>>, vector<16x256xbf16>
    %c0_1 = arith.constant 0 : index
    %c0_2 = arith.constant 0 : index
    %1 = vector.load %arg2[%c0_1, %c0_2] : memref<256x128xbf16, #tpu.memory_space<vmem>>, vector<256x128xbf16>
    %cst = arith.constant dense<0.000000e+00> : vector<16x128xf32>
    %2 = tpu.matmul %0, %1, %cst {dimension_numbers = #tpu.dot_dimension_numbers<[1], [0], [0], [1], [0, 0, 1, 1], [], []>} : vector<16x256xbf16>, vector<256x128xbf16>, vector<16x128xf32> -> vector<16x128xf32>
    %c0_3 = arith.constant 0 : index
    %c0_4 = arith.constant 0 : index
    %3 = vector.load %arg3[%c0_3, %c0_4] : memref<1x128xf32, #tpu.memory_space<vmem>>, vector<1x128xf32>
    %4 = vector.broadcast %3 : vector<1x128xf32> to vector<16x128xf32>
    %5 = arith.addf %2, %4 : vector<16x128xf32>
    %6 = arith.negf %5 : vector<16x128xf32>
    %7 = math.exp %6 : vector<16x128xf32>
    %cst_5 = arith.constant 1.000000e+00 : f32
    %8 = vector.broadcast %cst_5 : f32 to vector<16x128xf32>
    %9 = arith.addf %8, %7 : vector<16x128xf32>
    %10 = arith.divf %8, %9 : vector<16x128xf32>
    %11 = arith.mulf %5, %10 : vector<16x128xf32>
    %cst_6 = arith.constant 0.000000e+00 : f32
    %12 = vector.broadcast %cst_6 : f32 to vector<1x128xf32>
    %13 = vector.extract_strided_slice %11 {offsets = [0, 0], sizes = [15, 128], strides = [1, 1]} : vector<16x128xf32> to vector<15x128xf32>
    %14 = tpu.concatenate %12, %13 in 0 : vector<1x128xf32>, vector<15x128xf32> -> vector<16x128xf32>
    %15 = vector.extract_strided_slice %11 {offsets = [1, 0], sizes = [15, 128], strides = [1, 1]} : vector<16x128xf32> to vector<15x128xf32>
    %16 = tpu.concatenate %15, %12 in 0 : vector<15x128xf32>, vector<1x128xf32> -> vector<16x128xf32>
    %17 = tpu.concatenate %14, %11, %16 in 1 : vector<16x128xf32>, vector<16x128xf32>, vector<16x128xf32> -> vector<16x384xf32>
    %18 = arith.truncf %17 : vector<16x384xf32> to vector<16x384xbf16>
    %c0_7 = arith.constant 0 : index
    %c0_8 = arith.constant 0 : index
    %19 = vector.load %arg4[%c0_7, %c0_8] : memref<384x256xbf16, #tpu.memory_space<vmem>>, vector<384x256xbf16>
    %cst_9 = arith.constant dense<0.000000e+00> : vector<16x256xf32>
    %20 = tpu.matmul %18, %19, %cst_9 {dimension_numbers = #tpu.dot_dimension_numbers<[1], [0], [0], [1], [0, 0, 1, 1], [], []>} : vector<16x384xbf16>, vector<384x256xbf16>, vector<16x256xf32> -> vector<16x256xf32>
    %c0_10 = arith.constant 0 : index
    %c0_11 = arith.constant 0 : index
    %21 = vector.load %arg5[%c0_10, %c0_11] : memref<1x256xf32, #tpu.memory_space<vmem>>, vector<1x256xf32>
    %22 = vector.broadcast %21 : vector<1x256xf32> to vector<16x256xf32>
    %23 = arith.addf %20, %22 : vector<16x256xf32>
    %24 = arith.negf %23 : vector<16x256xf32>
    %25 = math.exp %24 : vector<16x256xf32>
    %cst_12 = arith.constant 1.000000e+00 : f32
    %26 = vector.broadcast %cst_12 : f32 to vector<16x256xf32>
    %27 = arith.addf %26, %25 : vector<16x256xf32>
    %28 = arith.divf %26, %27 : vector<16x256xf32>
    %29 = arith.mulf %23, %28 : vector<16x256xf32>
    %30 = arith.extf %0 : vector<16x256xbf16> to vector<16x256xf32>
    %31 = arith.addf %29, %30 : vector<16x256xf32>
    %c0_13 = arith.constant 0 : index
    %c0_14 = arith.constant 0 : index
    %32 = vector.load %arg6[%c0_13, %c0_14] : memref<16x256xf32, #tpu.memory_space<vmem>>, vector<16x256xf32>
    tpu.vector_store %arg6[%c0_13, %c0_14], %31 {strides = array<i32>} : memref<16x256xf32, #tpu.memory_space<vmem>>, vector<16x256xf32>,
    return
  }
  func.func @transform_0(%arg0: i32) -> (i32, i32) {
    %c0_i32 = arith.constant 0 : i32
    %c0_i32_0 = arith.constant 0 : i32
    return %arg0, %c0_i32 : i32, i32
  }
  func.func @transform_1(%arg0: i32) -> (i32, i32) {
    %c0_i32 = arith.constant 0 : i32
    %c0_i32_0 = arith.constant 0 : i32
    %c0_i32_1 = arith.constant 0 : i32
    return %c0_i32, %c0_i32_0 : i32, i32
  }
  func.func @transform_2(%arg0: i32) -> (i32, i32) {
    %c0_i32 = arith.constant 0 : i32
    %c0_i32_0 = arith.constant 0 : i32
    %c0_i32_1 = arith.constant 0 : i32
    return %c0_i32, %c0_i32_0 : i32, i32
  }
  func.func @transform_3(%arg0: i32) -> (i32, i32) {
    %c0_i32 = arith.constant 0 : i32
    %c0_i32_0 = arith.constant 0 : i32
    %c0_i32_1 = arith.constant 0 : i32
    return %c0_i32, %c0_i32_0 : i32, i32
  }
  func.func @transform_4(%arg0: i32) -> (i32, i32) {
    %c0_i32 = arith.constant 0 : i32
    %c0_i32_0 = arith.constant 0 : i32
    %c0_i32_1 = arith.constant 0 : i32
    return %c0_i32, %c0_i32_0 : i32, i32
  }
  func.func @transform_5(%arg0: i32) -> (i32, i32) {
    %c0_i32 = arith.constant 0 : i32
    %c0_i32_0 = arith.constant 0 : i32
    return %arg0, %c0_i32 : i32, i32
  }
}

module attributes {stable_mosaic.version = 11 : i64} {
  func.func @bottleneck_kernel(%arg0: i32, %arg1: memref<16x256xbf16, #tpu.memory_space<vmem>>, %arg2: memref<256x128xbf16, #tpu.memory_space<vmem>>, %arg3: memref<1x128xf32, #tpu.memory_space<vmem>>, %arg4: memref<384x256xbf16, #tpu.memory_space<vmem>>, %arg5: memref<1x256xf32, #tpu.memory_space<vmem>>, %arg6: memref<16x256xf32, #tpu.memory_space<vmem>>) attributes {dimension_semantics = [#tpu.dimension_semantics<parallel>], iteration_bounds = array<i64: 2>, scalar_prefetch = 0 : i64, scratch_operands = 0 : i64, tpu.core_type = #tpu.core_type<tc>, window_params = [{transform_indices = @transform_0, window_bounds = array<i64: 16, 256>}, {pipeline_mode = #tpu.pipeline_mode<synchronous>, transform_indices = @transform_1, window_bounds = array<i64: 256, 128>}, {pipeline_mode = #tpu.pipeline_mode<synchronous>, transform_indices = @transform_2, window_bounds = array<i64: 1, 128>}, {pipeline_mode = #tpu.pipeline_mode<synchronous>, transform_indices = @transform_3, window_bounds = array<i64: 384, 256>}, {pipeline_mode = #tpu.pipeline_mode<synchronous>, transform_indices = @transform_4, window_bounds = array<i64: 1, 256>}, {transform_indices = @transform_5, window_bounds = array<i64: 16, 256>}]} {
    %c0 = arith.constant 0 : index
    %c0_0 = arith.constant 0 : index
    %0 = vector.load %arg1[%c0, %c0_0] : memref<16x256xbf16, #tpu.memory_space<vmem>>, vector<16x256xbf16>
    %c0_1 = arith.constant 0 : index
    %c0_2 = arith.constant 0 : index
    %1 = vector.load %arg2[%c0_1, %c0_2] : memref<256x128xbf16, #tpu.memory_space<vmem>>, vector<256x128xbf16>
    %cst = arith.constant dense<0.000000e+00> : vector<16x128xf32>
    %2 = tpu.matmul %0, %1, %cst {dimension_numbers = #tpu.dot_dimension_numbers<[1], [0], [0], [1], [0, 0, 1, 1], [], []>} : vector<16x256xbf16>, vector<256x128xbf16>, vector<16x128xf32> -> vector<16x128xf32>
    %c0_3 = arith.constant 0 : index
    %c0_4 = arith.constant 0 : index
    %3 = vector.load %arg3[%c0_3, %c0_4] : memref<1x128xf32, #tpu.memory_space<vmem>>, vector<1x128xf32>
    %4 = vector.broadcast %3 : vector<1x128xf32> to vector<16x128xf32>
    %5 = arith.addf %2, %4 : vector<16x128xf32>
    %6 = arith.negf %5 : vector<16x128xf32>
    %7 = math.exp %6 : vector<16x128xf32>
    %cst_5 = arith.constant 1.000000e+00 : f32
    %8 = vector.broadcast %cst_5 : f32 to vector<16x128xf32>
    %9 = arith.addf %8, %7 : vector<16x128xf32>
    %10 = arith.divf %8, %9 : vector<16x128xf32>
    %11 = arith.mulf %5, %10 : vector<16x128xf32>
    %cst_6 = arith.constant 0.000000e+00 : f32
    %12 = vector.broadcast %cst_6 : f32 to vector<1x128xf32>
    %13 = vector.extract_strided_slice %11 {offsets = [0, 0], sizes = [15, 128], strides = [1, 1]} : vector<16x128xf32> to vector<15x128xf32>
    %14 = tpu.concatenate %12, %13 in 0 : vector<1x128xf32>, vector<15x128xf32> -> vector<16x128xf32>
    %15 = vector.extract_strided_slice %11 {offsets = [1, 0], sizes = [15, 128], strides = [1, 1]} : vector<16x128xf32> to vector<15x128xf32>
    %16 = tpu.concatenate %15, %12 in 0 : vector<15x128xf32>, vector<1x128xf32> -> vector<16x128xf32>
    %17 = tpu.concatenate %14, %11, %16 in 1 : vector<16x128xf32>, vector<16x128xf32>, vector<16x128xf32> -> vector<16x384xf32>
    %18 = arith.truncf %17 : vector<16x384xf32> to vector<16x384xbf16>
    %c0_7 = arith.constant 0 : index
    %c0_8 = arith.constant 0 : index
    %19 = vector.load %arg4[%c0_7, %c0_8] : memref<384x256xbf16, #tpu.memory_space<vmem>>, vector<384x256xbf16>
    %cst_9 = arith.constant dense<0.000000e+00> : vector<16x256xf32>
    %20 = tpu.matmul %18, %19, %cst_9 {dimension_numbers = #tpu.dot_dimension_numbers<[1], [0], [0], [1], [0, 0, 1, 1], [], []>} : vector<16x384xbf16>, vector<384x256xbf16>, vector<16x256xf32> -> vector<16x256xf32>
    %c0_10 = arith.constant 0 : index
    %c0_11 = arith.constant 0 : index
    %21 = vector.load %arg5[%c0_10, %c0_11] : memref<1x256xf32, #tpu.memory_space<vmem>>, vector<1x256xf32>
    %22 = vector.broadcast %21 : vector<1x256xf32> to vector<16x256xf32>
    %23 = arith.addf %20, %22 : vector<16x256xf32>
    %24 = arith.negf %23 : vector<16x256xf32>
    %25 = math.exp %24 : vector<16x256xf32>
    %cst_12 = arith.constant 1.000000e+00 : f32
    %26 = vector.broadcast %cst_12 : f32 to vector<16x256xf32>
    %27 = arith.addf %26, %25 : vector<16x256xf32>
    %28 = arith.divf %26, %27 : vector<16x256xf32>
    %29 = arith.mulf %23, %28 : vector<16x256xf32>
    %30 = arith.extf %0 : vector<16x256xbf16> to vector<16x256xf32>
    %31 = arith.addf %29, %30 : vector<16x256xf32>
    %c0_13 = arith.constant 0 : index
    %c0_14 = arith.constant 0 : index
    %32 = vector.load %arg6[%c0_13, %c0_14] : memref<16x256xf32, #tpu.memory_space<vmem>>, vector<16x256xf32>
    tpu.vector_store %arg6[%c0_13, %c0_14], %31 {strides = array<i32>} : memref<16x256xf32, #tpu.memory_space<vmem>>, vector<16x256xf32>,
    return
  }
  func.func @transform_0(%arg0: i32) -> (i32, i32) {
    %c0_i32 = arith.constant 0 : i32
    %c0_i32_0 = arith.constant 0 : i32
    return %arg0, %c0_i32 : i32, i32
  }
  func.func @transform_1(%arg0: i32) -> (i32, i32) {
    %c0_i32 = arith.constant 0 : i32
    %c0_i32_0 = arith.constant 0 : i32
    %c0_i32_1 = arith.constant 0 : i32
    return %c0_i32, %c0_i32_0 : i32, i32
  }
  func.func @transform_2(%arg0: i32) -> (i32, i32) {
    %c0_i32 = arith.constant 0 : i32
    %c0_i32_0 = arith.constant 0 : i32
    %c0_i32_1 = arith.constant 0 : i32
    return %c0_i32, %c0_i32_0 : i32, i32
  }
  func.func @transform_3(%arg0: i32) -> (i32, i32) {
    %c0_i32 = arith.constant 0 : i32
    %c0_i32_0 = arith.constant 0 : i32
    %c0_i32_1 = arith.constant 0 : i32
    return %c0_i32, %c0_i32_0 : i32, i32
  }
  func.func @transform_4(%arg0: i32) -> (i32, i32) {
    %c0_i32 = arith.constant 0 : i32
    %c0_i32_0 = arith.constant 0 : i32
    %c0_i32_1 = arith.constant 0 : i32
    return %c0_i32, %c0_i32_0 : i32, i32
  }
  func.func @transform_5(%arg0: i32) -> (i32, i32) {
    %c0_i32 = arith.constant 0 : i32
    %c0_i32_0 = arith.constant 0 : i32
    return %arg0, %c0_i32 : i32, i32
  }
}

</mosaic_0001>

<llo_original>
// kernel: tpu_custom_call.1
$region0: #{tpu_custom_call.1}
  #allocation0 [shape = 'u32[]', space=smem, size = 0x4, offset = 0x4, fixed_abs, tag = 'smem constant byte address 0x4 - core index']
  #allocation1 [shape = 'u32[144,128]{1,0:T(1,128)}', space=vmem, size = 0x12000, scoped, tag = 'internal scratch']
  %s0 = inlined_call_operand.hbm [shape: bf16[32,256], index: 0, kind: input, shape index: {}]
  %s1 = inlined_call_operand.hbm [shape: bf16[256,128], index: 1, kind: input, shape index: {}]
  %s2 = inlined_call_operand.vmem [shape: f32[1,128], index: 2, kind: input, shape index: {}]
  %s3 = inlined_call_operand.hbm [shape: bf16[384,256], index: 3, kind: input, shape index: {}]
  %s4 = inlined_call_operand.vmem [shape: f32[1,256], index: 4, kind: input, shape index: {}]
  %s5 = inlined_call_operand.hbm [shape: f32[32,256], index: 5, kind: output, shape index: {}]
  %s6 = sld [smem:[#allocation0]]
  $region65: #{tpu_custom_call.1} parent=0
    _
  %s8 = ssub.s32 1, %s6
  %s9 = scalar_select 0, %s8, %s6
  $region1: #{tpu_custom_call.1} parent=0
    #allocation2 [shape = 'u8[16384]{0}', space=vmem, size = 0x4000, scoped, tag = 'input window, operand 0']
    #allocation3 [shape = 's32[2]{0}', space=sflag, size = 0x8, scoped, tag = 'scoped memory for tpu_custom_call.1']
    #allocation4 [shape = 's32[2]{0}', space=sflag, size = 0x8, scoped, tag = 'scoped memory for tpu_custom_call.1']
    #allocation5 [shape = 'u8[65536]{0}', space=vmem, size = 0x10000, scoped, tag = 'input window, operand 1, single buffered']
    #allocation6 [shape = 's32[1]{0}', space=sflag, size = 0x4, scoped, tag = 'scoped memory for tpu_custom_call.1']
    #allocation7 [shape = 'u8[196608]{0}', space=vmem, size = 0x30000, scoped, tag = 'input window, operand 3, single buffered']
    #allocation8 [shape = 'u8[32768]{0}', space=vmem, size = 0x8000, scoped, tag = 'output window, operand 0']
    %10 = vsyncpa [#allocation3], 0
    %s11 = scalar_lea.sflag [#allocation3], 1
    %12 = vsyncpa %s11, 0
    %13 = vsyncpa [#allocation6], 0
    %14 = vsyncpa [#allocation4], 0
    %s15 = scalar_lea.sflag [#allocation4], 1
    %16 = vsyncpa %s15, 0
    loop: start=0, step=1, limit=4
    $region2: #{tpu_custom_call.1} parent=1 // loop_pre_header
      _
    $region3: #{tpu_custom_call.1} parent=1 // loop_header
      %s18 = sphi 0, %s22
      %p19 = scmp.ge.s32.totalorder %s18, 4
      %s28 = sphi 0, %s30
      %s31 = sphi 0, %s28
      %s32 = sphi 0, %s31
      %s48 = sphi 0, %s32
      %s52 = sphi 0, %s52
      %s54 = sphi 0, %s52
      %s55 = sphi 0, %s54
      %s69 = sphi 0, %s55
      %s73 = sphi 0, %s73
      %s75 = sphi 0, %s73
      %s76 = sphi 0, %s75
      %s90 = sphi 0, %s76
      %s94 = sphi 0, %s94
      %s96 = sphi 0, %s94
      %s97 = sphi 0, %s96
      %s111 = sphi 0, %s97
      %s115 = sphi 0, %s115
      %s117 = sphi 0, %s115
      %s118 = sphi 0, %s117
      %s132 = sphi 0, %s118
      %s138 = sphi 0, %s140
      %s141 = sphi 0, %s138
      %s142 = sphi 0, %s141
      %s158 = sphi 0, %s142
    $region4: #{tpu_custom_call.1} parent=1 // loop_header_branch
      %21 = sbr.rel (%p19) target = $region8
    $region5: #{tpu_custom_call.1} parent=1 // loop_body
      %s23 = ssub.s32 %s18, 1
      %s24 = ssub.s32 %s18, 2
      %s25 = sadd.s32 %s18, 1
      %s26 = ssub.s32 %s18, %s25
      %p27 = scmp.eq.s32.totalorder %s26, 0
      %s29 = sadd.s32 %s28, 1
      %s30 = scalar_select %p27, %s28, %s29
      %p33 = pneg %p27
      %p34 = scmp.eq.s32.totalorder %s18, 1
      %p35 = por %p33, %p34
      %p36 = scmp.ne.s32.totalorder %s28, %s31
      %p37 = scmp.eq.s32.totalorder %s18, 0
      %p38 = por %p36, %p37
      %p39 = scmp.ne.s32.totalorder %s28, %s31
      %p40 = scmp.eq.s32.totalorder %s23, 1
      %p41 = por %p39, %p40
      %p42 = scmp.ne.s32.totalorder %s31, %s32
      %p43 = scmp.eq.s32.totalorder %s23, 0
      %p44 = por %p42, %p43
      %p45 = scmp.ne.s32.totalorder %s31, %s32
      %p46 = scmp.eq.s32.totalorder %s24, 1
      %p47 = por %p45, %p46
      %p49 = scmp.ne.s32.totalorder %s32, %s48
      %p50 = scmp.eq.s32.totalorder %s24, 0
      %p51 = por %p49, %p50
      %s53 = sadd.s32 %s52, 1
      %p56 = scmp.eq.s32.totalorder %s18, 1
      %p57 = scmp.ne.s32.totalorder %s52, %s54
      %p58 = scmp.eq.s32.totalorder %s18, 0
      %p59 = por %p57, %p58
      %p60 = scmp.ne.s32.totalorder %s52, %s54
      %p61 = scmp.eq.s32.totalorder %s23, 1
      %p62 = por %p60, %p61
      %p63 = scmp.ne.s32.totalorder %s54, %s55
      %p64 = scmp.eq.s32.totalorder %s23, 0
      %p65 = por %p63, %p64
      %p66 = scmp.ne.s32.totalorder %s54, %s55
      %p67 = scmp.eq.s32.totalorder %s24, 1
      %p68 = por %p66, %p67
      %p70 = scmp.ne.s32.totalorder %s55, %s69
      %p71 = scmp.eq.s32.totalorder %s24, 0
      %p72 = por %p70, %p71
      %s74 = sadd.s32 %s73, 1
      %p77 = scmp.eq.s32.totalorder %s18, 1
      %p78 = scmp.ne.s32.totalorder %s73, %s75
      %p79 = scmp.eq.s32.totalorder %s18, 0
      %p80 = por %p78, %p79
      %p81 = scmp.ne.s32.totalorder %s73, %s75
      %p82 = scmp.eq.s32.totalorder %s23, 1
      %p83 = por %p81, %p82
      %p84 = scmp.ne.s32.totalorder %s75, %s76
      %p85 = scmp.eq.s32.totalorder %s23, 0
      %p86 = por %p84, %p85
      %p87 = scmp.ne.s32.totalorder %s75, %s76
      %p88 = scmp.eq.s32.totalorder %s24, 1
      %p89 = por %p87, %p88
      %p91 = scmp.ne.s32.totalorder %s76, %s90
      %p92 = scmp.eq.s32.totalorder %s24, 0
      %p93 = por %p91, %p92
      %s95 = sadd.s32 %s94, 1
      %p98 = scmp.eq.s32.totalorder %s18, 1
      %p99 = scmp.ne.s32.totalorder %s94, %s96
      %p100 = scmp.eq.s32.totalorder %s18, 0
      %p101 = por %p99, %p100
      %p102 = scmp.ne.s32.totalorder %s94, %s96
      %p103 = scmp.eq.s32.totalorder %s23, 1
      %p104 = por %p102, %p103
      %p105 = scmp.ne.s32.totalorder %s96, %s97
      %p106 = scmp.eq.s32.totalorder %s23, 0
      %p107 = por %p105, %p106
      %p108 = scmp.ne.s32.totalorder %s96, %s97
      %p109 = scmp.eq.s32.totalorder %s24, 1
      %p110 = por %p108, %p109
      %p112 = scmp.ne.s32.totalorder %s97, %s111
      %p113 = scmp.eq.s32.totalorder %s24, 0
      %p114 = por %p112, %p113
      %s116 = sadd.s32 %s115, 1
      %p119 = scmp.eq.s32.totalorder %s18, 1
      %p120 = scmp.ne.s32.totalorder %s115, %s117
      %p121 = scmp.eq.s32.totalorder %s18, 0
      %p122 = por %p120, %p121
      %p123 = scmp.ne.s32.totalorder %s115, %s117
      %p124 = scmp.eq.s32.totalorder %s23, 1
      %p125 = por %p123, %p124
      %p126 = scmp.ne.s32.totalorder %s117, %s118
      %p127 = scmp.eq.s32.totalorder %s23, 0
      %p128 = por %p126, %p127
      %p129 = scmp.ne.s32.totalorder %s117, %s118
      %p130 = scmp.eq.s32.totalorder %s24, 1
      %p131 = por %p129, %p130
      %p133 = scmp.ne.s32.totalorder %s118, %s132
      %p134 = scmp.eq.s32.totalorder %s24, 0
      %p135 = por %p133, %p134
      %s136 = ssub.s32 %s18, %s25
      %p137 = scmp.eq.s32.totalorder %s136, 0
      %s139 = sadd.s32 %s138, 1
      %s140 = scalar_select %p137, %s138, %s139
      %p143 = pneg %p137
      %p144 = scmp.eq.s32.totalorder %s18, 1
      %p145 = por %p143, %p144
      %p146 = scmp.ne.s32.totalorder %s138, %s141
      %p147 = scmp.eq.s32.totalorder %s18, 0
      %p148 = por %p146, %p147
      %p149 = scmp.ne.s32.totalorder %s138, %s141
      %p150 = scmp.eq.s32.totalorder %s23, 1
      %p151 = por %p149, %p150
      %p152 = scmp.ne.s32.totalorder %s141, %s142
      %p153 = scmp.eq.s32.totalorder %s23, 0
      %p154 = por %p152, %p153
      %p155 = scmp.ne.s32.totalorder %s141, %s142
      %p156 = scmp.eq.s32.totalorder %s24, 1
      %p157 = por %p155, %p156
      %p159 = scmp.ne.s32.totalorder %s142, %s158
      %p160 = scmp.eq.s32.totalorder %s24, 0
      %p161 = por %p159, %p160
      %p162 = scmp.le.s32.totalorder 1, %s18
      %p163 = scmp.lt.s32.totalorder %s18, 3
      %p164 = pnand %p162, %p163
      %p165 = pneg %p164
      // Predicated region
      $region9: #{tpu_custom_call.1} parent=5 // pred_check
        _
      $region10: #{tpu_custom_call.1} parent=5 // pred_check_branch
        %167 = sbr.rel (%p164) target = $region12
      $region11: #{tpu_custom_call.1} parent=5 // pred_region
        %s168 = ssub.s32 %s18, 1
        // Predicated region
        $region13: #{tpu_custom_call.1} parent=11 // pred_check
          %p169 = pneg %p65
        $region14: #{tpu_custom_call.1} parent=11 // pred_check_branch
          %171 = sbr.rel (%p169) target = $region16
        $region15: #{tpu_custom_call.1} parent=11 // pred_region
          %s173 = ssub.s32 2048, 2048
          %174 = vsyncadd [#allocation6], %s173
          %s175 = sshll.u32 [#allocation5], 4
          %s176 = int_to_ptr.vmem [resolvable:$true] %s175
          %181 = dma.hbm_to_vmem [thread:$0]  %s1, 2048, %s176, [#allocation6], 64, 64, 4
        $region16: #{tpu_custom_call.1} parent=11 // pred_fallthru
          _
        // Predicated region
        $region17: #{tpu_custom_call.1} parent=11 // pred_check
          %p182 = pneg %p86
        $region18: #{tpu_custom_call.1} parent=11 // pred_check_branch
          %184 = sbr.rel (%p182) target = $region20
        $region19: #{tpu_custom_call.1} parent=11 // pred_region
          _
        $region20: #{tpu_custom_call.1} parent=11 // pred_fallthru
          _
        // Predicated region
        $region21: #{tpu_custom_call.1} parent=11 // pred_check
          %p185 = pneg %p107
        $region22: #{tpu_custom_call.1} parent=11 // pred_check_branch
          %187 = sbr.rel (%p185) target = $region24
        $region23: #{tpu_custom_call.1} parent=11 // pred_region
          %s189 = ssub.s32 6144, 6144
          %190 = vsyncadd [#allocation6], %s189
          %s191 = sshll.u32 [#allocation7], 4
          %s192 = int_to_ptr.vmem [resolvable:$true] %s191
          %197 = dma.hbm_to_vmem [thread:$0]  %s3, 6144, %s192, [#allocation6], 128, 128, 8
        $region24: #{tpu_custom_call.1} parent=11 // pred_fallthru
          _
        // Predicated region
        $region25: #{tpu_custom_call.1} parent=11 // pred_check
          %p198 = pneg %p128
        $region26: #{tpu_custom_call.1} parent=11 // pred_check_branch
          %200 = sbr.rel (%p198) target = $region28
        $region27: #{tpu_custom_call.1} parent=11 // pred_region
          _
        $region28: #{tpu_custom_call.1} parent=11 // pred_fallthru
          _
      $region12: #{tpu_custom_call.1} parent=5 // pred_fallthru
        _
      %p201 = scmp.lt.s32.totalorder %s18, 2
      // Predicated region
      $region29: #{tpu_custom_call.1} parent=5 // pred_check
        %p202 = pneg %p201
      $region30: #{tpu_custom_call.1} parent=5 // pred_check_branch
        %204 = sbr.rel (%p202) target = $region32
      $region31: #{tpu_custom_call.1} parent=5 // pred_region
        // Predicated region
        $region33: #{tpu_custom_call.1} parent=31 // pred_check
          %p205 = pneg %p38
        $region34: #{tpu_custom_call.1} parent=31 // pred_check_branch
          %207 = sbr.rel (%p205) target = $region36
        $region35: #{tpu_custom_call.1} parent=31 // pred_region
          %s208 = sand.u32 %s28, 1
          %s209 = scalar_lea.sflag [#allocation3], %s208
          %s210 = sand.u32 %s28, 1
          %s211 = smul.addr %s210, 16
          %s212 = scalar_lea.vmem [#allocation2], %s211
          %s213 = smul.u32 2, %s18
          %s215 = ssub.s32 256, 256
          %216 = vsyncadd %s209, %s215
          %s217 = smul.addr %s213, 2
          %s218 = smul.addr %s217, 64
          %s219 = scalar_lea.hbm %s0, %s218
          %s220 = sshll.u32 %s212, 4
          %s221 = int_to_ptr.vmem [resolvable:$true] %s220
          %226 = dma.hbm_to_vmem [thread:$0]  %s219, 256, %s221, %s209, 128, 128, 8
        $region36: #{tpu_custom_call.1} parent=31 // pred_fallthru
          _
      $region32: #{tpu_custom_call.1} parent=5 // pred_fallthru
        _
      %p227 = scmp.le.s32.totalorder 1, %s18
      %p228 = scmp.lt.s32.totalorder %s18, 3
      %p229 = pnand %p227, %p228
      %p230 = pneg %p229
      // Predicated region
      $region37: #{tpu_custom_call.1} parent=5 // pred_check
        _
      $region38: #{tpu_custom_call.1} parent=5 // pred_check_branch
        %232 = sbr.rel (%p229) target = $region40
      $region39: #{tpu_custom_call.1} parent=5 // pred_region
        %s233 = ssub.s32 %s18, 1
        %s234 = sand.u32 %s31, 1
        %s235 = scalar_lea.sflag [#allocation3], %s234
        %s236 = sand.u32 %s31, 1
        %s237 = smul.addr %s236, 16
        %s238 = scalar_lea.vmem [#allocation2], %s237
        // Predicated region
        $region41: #{tpu_custom_call.1} parent=39 // pred_check
          %p239 = pneg %p44
        $region42: #{tpu_custom_call.1} parent=39 // pred_check_branch
          %241 = sbr.rel (%p239) target = $region44
        $region43: #{tpu_custom_call.1} parent=39 // pred_region
          %242 = dma.done %s235, 256
        $region44: #{tpu_custom_call.1} parent=39 // pred_fallthru
          _
        // Predicated region
        $region45: #{tpu_custom_call.1} parent=39 // pred_check
          %p243 = pneg %p65
        $region46: #{tpu_custom_call.1} parent=39 // pred_check_branch
          %245 = sbr.rel (%p243) target = $region48
        $region47: #{tpu_custom_call.1} parent=39 // pred_region
          %246 = dma.done [#allocation6], 2048
        $region48: #{tpu_custom_call.1} parent=39 // pred_fallthru
          _
        // Predicated region
        $region49: #{tpu_custom_call.1} parent=39 // pred_check
          %p247 = pneg %p107
        $region50: #{tpu_custom_call.1} parent=39 // pred_check_branch
          %249 = sbr.rel (%p247) target = $region52
        $region51: #{tpu_custom_call.1} parent=39 // pred_region
          %250 = dma.done [#allocation6], 6144
        $region52: #{tpu_custom_call.1} parent=39 // pred_fallthru
          _
        %s251 = sand.u32 %s31, 1
        %s252 = scalar_lea.sflag [#allocation3], %s251
        %s253 = sand.u32 %s31, 1
        %s254 = smul.addr %s253, 16
        %s255 = scalar_lea.vmem [#allocation2], %s254
        %p256 = pneg %p44
        %p257 = pneg %p41
        %p258 = pneg %p65
        %p259 = pneg %p62
        %p260 = pneg %p86
        %p261 = pneg %p83
        %p262 = pneg %p107
        %p263 = pneg %p104
        %p264 = pneg %p128
        %p265 = pneg %p125
        %p266 = pneg %p154
        %p267 = pneg %p151
        %s268 = sand.u32 %s141, 1
        %s269 = scalar_lea.sflag [#allocation4], %s268
        %s270 = sand.u32 %s141, 1
        %s271 = smul.addr %s270, 32
        %s272 = scalar_lea.vmem [#allocation8], %s271
        %s273 = smul.u32 2, %s23
        %s274 = smul.u32 2, %s23
        %v276 = vld [vmem:[%s238] sm:$0xff]
        %v277 = vld [vmem:[%s238 + $0x8] sm:$0xff]
        %v278 = vld [vmem:[#allocation5] sm:$0xf]
        %v279 = vld [vmem:[#allocation5 + $0x4] sm:$0xf]
        %v280 = vld [vmem:[#allocation5 + $0x8] sm:$0xf]
        %v281 = vld [vmem:[#allocation5 + $0xc] sm:$0xf]
        %v282 = vld [vmem:[#allocation5 + $0x10] sm:$0xf]
        %v283 = vld [vmem:[#allocation5 + $0x14] sm:$0xf]
        %v284 = vld [vmem:[#allocation5 + $0x18] sm:$0xf]
        %v285 = vld [vmem:[#allocation5 + $0x1c] sm:$0xf]
        %v286 = vld [vmem:[#allocation5 + $0x20] sm:$0xf]
        %v287 = vld [vmem:[#allocation5 + $0x24] sm:$0xf]
        %v288 = vld [vmem:[#allocation5 + $0x28] sm:$0xf]
        %v289 = vld [vmem:[#allocation5 + $0x2c] sm:$0xf]
        %v290 = vld [vmem:[#allocation5 + $0x30] sm:$0xf]
        %v291 = vld [vmem:[#allocation5 + $0x34] sm:$0xf]
        %v292 = vld [vmem:[#allocation5 + $0x38] sm:$0xf]
        %v293 = vld [vmem:[#allocation5 + $0x3c] sm:$0xf]
        %v294 = vld [vmem:[#allocation5 + $0x40] sm:$0xf]
        %v295 = vld [vmem:[#allocation5 + $0x44] sm:$0xf]
        %v296 = vld [vmem:[#allocation5 + $0x48] sm:$0xf]
        %v297 = vld [vmem:[#allocation5 + $0x4c] sm:$0xf]
        %v298 = vld [vmem:[#allocation5 + $0x50] sm:$0xf]
        %v299 = vld [vmem:[#allocation5 + $0x54] sm:$0xf]
        %v300 = vld [vmem:[#allocation5 + $0x58] sm:$0xf]
        %v301 = vld [vmem:[#allocation5 + $0x5c] sm:$0xf]
        %v302 = vld [vmem:[#allocation5 + $0x60] sm:$0xf]
        %v303 = vld [vmem:[#allocation5 + $0x64] sm:$0xf]
        %v304 = vld [vmem:[#allocation5 + $0x68] sm:$0xf]
        %v305 = vld [vmem:[#allocation5 + $0x6c] sm:$0xf]
        %v306 = vld [vmem:[#allocation5 + $0x70] sm:$0xf]
        %v307 = vld [vmem:[#allocation5 + $0x74] sm:$0xf]
        %v308 = vld [vmem:[#allocation5 + $0x78] sm:$0xf]
        %v309 = vld [vmem:[#allocation5 + $0x7c] sm:$0xf]
        %v310 = vld [vmem:[%s2] sm:$0x1]
        %v312 = vlaneseq
        %v313 = vshrl.u32 %v312, 7
        %v314 = vsub.s32 0, %v313
        %v315 = vrot.slane %v310, %v314
        %v319 = vunpack.c.l.b16 %v276
        %v320 = vunpack.c.h.b16 %v276
        %v321 = vunpack.c.l.b16 %v277
        %v322 = vunpack.c.h.b16 %v277
        %v323 = vpack.c.b16 %v321, %v319
        %v324 = vpack.c.b16 %v322, %v320
        %v359 = vunpack.c.l.b16 %v278
        %v360 = vunpack.c.l.b16 %v279
        %v361 = vunpack.c.l.b16 %v280
        %v362 = vunpack.c.l.b16 %v281
        %v363 = vunpack.c.l.b16 %v282
        %v364 = vunpack.c.l.b16 %v283
        %v365 = vunpack.c.l.b16 %v284
        %v366 = vunpack.c.l.b16 %v285
        %v367 = vunpack.c.l.b16 %v286
        %v368 = vunpack.c.l.b16 %v287
        %v369 = vunpack.c.l.b16 %v288
        %v370 = vunpack.c.l.b16 %v289
        %v371 = vunpack.c.l.b16 %v290
        %v372 = vunpack.c.l.b16 %v291
        %v373 = vunpack.c.l.b16 %v292
        %v374 = vunpack.c.l.b16 %v293
        %v375 = vunpack.c.l.b16 %v294
        %v376 = vunpack.c.l.b16 %v295
        %v377 = vunpack.c.l.b16 %v296
        %v378 = vunpack.c.l.b16 %v297
        %v379 = vunpack.c.l.b16 %v298
        %v380 = vunpack.c.l.b16 %v299
        %v381 = vunpack.c.l.b16 %v300
        %v382 = vunpack.c.l.b16 %v301
        %v383 = vunpack.c.l.b16 %v302
        %v384 = vunpack.c.l.b16 %v303
        %v385 = vunpack.c.l.b16 %v304
        %v386 = vunpack.c.l.b16 %v305
        %v387 = vunpack.c.l.b16 %v306
        %v388 = vunpack.c.l.b16 %v307
        %v389 = vunpack.c.l.b16 %v308
        %v390 = vunpack.c.l.b16 %v309
        %v391 = vpack.c.b16 %v360, %v359
        %v392 = vpack.c.b16 %v362, %v361
        %v393 = vpack.c.b16 %v364, %v363
        %v394 = vpack.c.b16 %v366, %v365
        %v395 = vpack.c.b16 %v368, %v367
        %v396 = vpack.c.b16 %v370, %v369
        %v397 = vpack.c.b16 %v372, %v371
        %v398 = vpack.c.b16 %v374, %v373
        %v399 = vpack.c.b16 %v376, %v375
        %v400 = vpack.c.b16 %v378, %v377
        %v401 = vpack.c.b16 %v380, %v379
        %v402 = vpack.c.b16 %v382, %v381
        %v403 = vpack.c.b16 %v384, %v383
        %v404 = vpack.c.b16 %v386, %v385
        %v405 = vpack.c.b16 %v388, %v387
        %v406 = vpack.c.b16 %v390, %v389
        %423 = vmatprep.subr.bf16.mxu0 0
        %424 = vmatpush1.bf16.msra.mxu0 %v391
        %425 = vmatprep.subr.bf16.mxu0 0
        %426 = vmatpush1.bf16.msra.mxu0 %v392
        %427 = vmatprep.subr.bf16.mxu0 0
        %428 = vmatpush1.bf16.msra.mxu0 %v393
        %429 = vmatprep.subr.bf16.mxu0 0
        %430 = vmatpush1.bf16.msra.mxu0 %v394
        %431 = vmatprep.subr.bf16.mxu0 0
        %432 = vmatpush1.bf16.msra.mxu0 %v395
        %433 = vmatprep.subr.bf16.mxu0 0
        %434 = vmatpush1.bf16.msra.mxu0 %v396
        %435 = vmatprep.subr.bf16.mxu0 0
        %436 = vmatpush1.bf16.msra.mxu0 %v397
        %437 = vmatprep.subr.bf16.mxu0 0
        %438 = vmatpush1.bf16.msra.mxu0 %v398
        %439 = vmatprep.subr.bf16.mxu0 0
        %440 = vmatpush1.bf16.msra.mxu0 %v399
        %441 = vmatprep.subr.bf16.mxu0 0
        %442 = vmatpush1.bf16.msra.mxu0 %v400
        %443 = vmatprep.subr.bf16.mxu0 0
        %444 = vmatpush1.bf16.msra.mxu0 %v401
        %445 = vmatprep.subr.bf16.mxu0 0
        %446 = vmatpush1.bf16.msra.mxu0 %v402
        %447 = vmatprep.subr.bf16.mxu0 0
        %448 = vmatpush1.bf16.msra.mxu0 %v403
        %449 = vmatprep.subr.bf16.mxu0 0
        %450 = vmatpush1.bf16.msra.mxu0 %v404
        %451 = vmatprep.subr.bf16.mxu0 0
        %452 = vmatpush1.bf16.msra.mxu0 %v405
        %453 = vmatprep.subr.bf16.mxu0 0
        %454 = vmatpush1.bf16.msra.mxu0 %v406
        %455 = vmatprep.mubr.bf16.mxu0 %v324
        %456 = vmatmul.mubr.bf16.gmra.mrb[0].mxu0 %v323
        %v457 = vpop.f32.mrb[0].mxu0
        %v458 = vadd.f32 %v315, %v457
        %v459 = vpop.f32.mrb[0].mxu0
        %v460 = vpop.f32.mrb[0].mxu0
        %v461 = vadd.f32 %v315, %v460
        %v462 = vpop.f32.mrb[0].mxu0
        %463 = vdwg.mxu0
        %v464 = vxor.u32 %v458, 2147483648
        %v465 = vxor.u32 %v461, 2147483648
        %v466 = vmul.f32 %v464, 1.442695
        %v467 = vpow.pop %v466
        %v468 = vmul.f32 %v465, 1.442695
        %v469 = vpow.pop %v468
        %v470 = vadd.f32 %v467, 1.0
        %v471 = vadd.f32 %v469, 1.0
        %v472 = vrcp.pop %v470
        %v473 = vmul.f32 1.0, %v472
        %v474 = vrcp.pop %v471
        %v475 = vmul.f32 1.0, %v474
        %v476 = vmul.f32 %v458, %v473
        %v477 = vmul.f32 %v461, %v475
        %vm480 = vcmask 1040384
        %v481 = vrot.slane %v476, 7
        %v482 = vrot.slane %v477, 7
        %v483 = vsel %vm480, %v481, %v482
        %v486 = vsel %vm480, 0.0, %v481
        %vm487 = vcmask 1046528
        %v488 = vrot.slane %v476, 1
        %v489 = vrot.slane %v477, 1
        %v490 = vsel %vm487, %v488, %v489
        %v493 = vsel %vm487, %v489, 0.0
        %v494 = vpack.c.bf16 %v483, %v486
        %v495 = vpack.c.bf16 %v477, %v476
        %v496 = vpack.c.bf16 %v493, %v490
        %v497 = vld [vmem:[#allocation7] sm:$0xff]
        %v498 = vld [vmem:[#allocation7 + $0x8] sm:$0xff]
        %v499 = vld [vmem:[#allocation7 + $0x10] sm:$0xff]
        %v500 = vld [vmem:[#allocation7 + $0x18] sm:$0xff]
        %v501 = vld [vmem:[#allocation7 + $0x20] sm:$0xff]
        %v502 = vld [vmem:[#allocation7 + $0x28] sm:$0xff]
        %v503 = vld [vmem:[#allocation7 + $0x30] sm:$0xff]
        %v504 = vld [vmem:[#allocation7 + $0x38] sm:$0xff]
        %v505 = vld [vmem:[#allocation7 + $0x40] sm:$0xff]
        %v506 = vld [vmem:[#allocation7 + $0x48] sm:$0xff]
        %v507 = vld [vmem:[#allocation7 + $0x50] sm:$0xff]
        %v508 = vld [vmem:[#allocation7 + $0x58] sm:$0xff]
        %v509 = vld [vmem:[#allocation7 + $0x60] sm:$0xff]
        %v510 = vld [vmem:[#allocation7 + $0x68] sm:$0xff]
        %v511 = vld [vmem:[#allocation7 + $0x70] sm:$0xff]
        %v512 = vld [vmem:[#allocation7 + $0x78] sm:$0xff]
        %v513 = vld [vmem:[#allocation7 + $0x80] sm:$0xff]
        %v514 = vld [vmem:[#allocation7 + $0x88] sm:$0xff]
        %v515 = vld [vmem:[#allocation7 + $0x90] sm:$0xff]
        %v516 = vld [vmem:[#allocation7 + $0x98] sm:$0xff]
        %v517 = vld [vmem:[#allocation7 + $0xa0] sm:$0xff]
        %v518 = vld [vmem:[#allocation7 + $0xa8] sm:$0xff]
        %v519 = vld [vmem:[#allocation7 + $0xb0] sm:$0xff]
        %v520 = vld [vmem:[#allocation7 + $0xb8] sm:$0xff]
        %v521 = vld [vmem:[#allocation7 + $0xc0] sm:$0xff]
        %v522 = vld [vmem:[#allocation7 + $0xc8] sm:$0xff]
        %v523 = vld [vmem:[#allocation7 + $0xd0] sm:$0xff]
        %v524 = vld [vmem:[#allocation7 + $0xd8] sm:$0xff]
        %v525 = vld [vmem:[#allocation7 + $0xe0] sm:$0xff]
        %v526 = vld [vmem:[#allocation7 + $0xe8] sm:$0xff]
        %v527 = vld [vmem:[#allocation7 + $0xf0] sm:$0xff]
        %v528 = vld [vmem:[#allocation7 + $0xf8] sm:$0xff]
        %v529 = vld [vmem:[#allocation7 + $0x100] sm:$0xff]
        %v530 = vld [vmem:[#allocation7 + $0x108] sm:$0xff]
        %v531 = vld [vmem:[#allocation7 + $0x110] sm:$0xff]
        %v532 = vld [vmem:[#allocation7 + $0x118] sm:$0xff]
        %v533 = vld [vmem:[#allocation7 + $0x120] sm:$0xff]
        %v534 = vld [vmem:[#allocation7 + $0x128] sm:$0xff]
        %v535 = vld [vmem:[#allocation7 + $0x130] sm:$0xff]
        %v536 = vld [vmem:[#allocation7 + $0x138] sm:$0xff]
        %v537 = vld [vmem:[#allocation7 + $0x140] sm:$0xff]
        %v538 = vld [vmem:[#allocation7 + $0x148] sm:$0xff]
        %v539 = vld [vmem:[#allocation7 + $0x150] sm:$0xff]
        %v540 = vld [vmem:[#allocation7 + $0x158] sm:$0xff]
        %v541 = vld [vmem:[#allocation7 + $0x160] sm:$0xff]
        %v542 = vld [vmem:[#allocation7 + $0x168] sm:$0xff]
        %v543 = vld [vmem:[#allocation7 + $0x170] sm:$0xff]
        %v544 = vld [vmem:[#allocation7 + $0x178] sm:$0xff]
        %v545 = vld [vmem:[%s4] sm:$0x3]
        %v547 = vlaneseq
        %v548 = vshrl.u32 %v547, 7
        %v549 = vsub.s32 0, %v548
        %v550 = vrot.slane %v545, %v549
        %v551 = vlaneseq
        %v552 = vshrl.u32 %v551, 7
        %v553 = vsub.s32 1, %v552
        %v554 = vrot.slane %v545, %v553
        %v605 = vunpack.c.l.b16 %v497
        %v606 = vunpack.c.h.b16 %v497
        %v607 = vunpack.c.l.b16 %v498
        %v608 = vunpack.c.h.b16 %v498
        %v609 = vunpack.c.l.b16 %v499
        %v610 = vunpack.c.h.b16 %v499
        %v611 = vunpack.c.l.b16 %v500
        %v612 = vunpack.c.h.b16 %v500
        %v613 = vunpack.c.l.b16 %v501
        %v614 = vunpack.c.h.b16 %v501
        %v615 = vunpack.c.l.b16 %v502
        %v616 = vunpack.c.h.b16 %v502
        %v617 = vunpack.c.l.b16 %v503
        %v618 = vunpack.c.h.b16 %v503
        %v619 = vunpack.c.l.b16 %v504
        %v620 = vunpack.c.h.b16 %v504
        %v621 = vunpack.c.l.b16 %v505
        %v622 = vunpack.c.h.b16 %v505
        %v623 = vunpack.c.l.b16 %v506
        %v624 = vunpack.c.h.b16 %v506
        %v625 = vunpack.c.l.b16 %v507
        %v626 = vunpack.c.h.b16 %v507
        %v627 = vunpack.c.l.b16 %v508
        %v628 = vunpack.c.h.b16 %v508
        %v629 = vunpack.c.l.b16 %v509
        %v630 = vunpack.c.h.b16 %v509
        %v631 = vunpack.c.l.b16 %v510
        %v632 = vunpack.c.h.b16 %v510
        %v633 = vunpack.c.l.b16 %v511
        %v634 = vunpack.c.h.b16 %v511
        %v635 = vunpack.c.l.b16 %v512
        %v636 = vunpack.c.h.b16 %v512
        %v637 = vunpack.c.l.b16 %v513
        %v638 = vunpack.c.h.b16 %v513
        %v639 = vunpack.c.l.b16 %v514
        %v640 = vunpack.c.h.b16 %v514
        %v641 = vunpack.c.l.b16 %v515
        %v642 = vunpack.c.h.b16 %v515
        %v643 = vunpack.c.l.b16 %v516
        %v644 = vunpack.c.h.b16 %v516
        %v645 = vunpack.c.l.b16 %v517
        %v646 = vunpack.c.h.b16 %v517
        %v647 = vunpack.c.l.b16 %v518
        %v648 = vunpack.c.h.b16 %v518
        %v649 = vunpack.c.l.b16 %v519
        %v650 = vunpack.c.h.b16 %v519
        %v651 = vunpack.c.l.b16 %v520
        %v652 = vunpack.c.h.b16 %v520
        %v653 = vunpack.c.l.b16 %v521
        %v654 = vunpack.c.h.b16 %v521
        %v655 = vunpack.c.l.b16 %v522
        %v656 = vunpack.c.h.b16 %v522
        %v657 = vunpack.c.l.b16 %v523
        %v658 = vunpack.c.h.b16 %v523
        %v659 = vunpack.c.l.b16 %v524
        %v660 = vunpack.c.h.b16 %v524
        %v661 = vunpack.c.l.b16 %v525
        %v662 = vunpack.c.h.b16 %v525
        %v663 = vunpack.c.l.b16 %v526
        %v664 = vunpack.c.h.b16 %v526
        %v665 = vunpack.c.l.b16 %v527
        %v666 = vunpack.c.h.b16 %v527
        %v667 = vunpack.c.l.b16 %v528
        %v668 = vunpack.c.h.b16 %v528
        %v669 = vunpack.c.l.b16 %v529
        %v670 = vunpack.c.h.b16 %v529
        %v671 = vunpack.c.l.b16 %v530
        %v672 = vunpack.c.h.b16 %v530
        %v673 = vunpack.c.l.b16 %v531
        %v674 = vunpack.c.h.b16 %v531
        %v675 = vunpack.c.l.b16 %v532
        %v676 = vunpack.c.h.b16 %v532
        %v677 = vunpack.c.l.b16 %v533
        %v678 = vunpack.c.h.b16 %v533
        %v679 = vunpack.c.l.b16 %v534
        %v680 = vunpack.c.h.b16 %v534
        %v681 = vunpack.c.l.b16 %v535
        %v682 = vunpack.c.h.b16 %v535
        %v683 = vunpack.c.l.b16 %v536
        %v684 = vunpack.c.h.b16 %v536
        %v685 = vunpack.c.l.b16 %v537
        %v686 = vunpack.c.h.b16 %v537
        %v687 = vunpack.c.l.b16 %v538
        %v688 = vunpack.c.h.b16 %v538
        %v689 = vunpack.c.l.b16 %v539
        %v690 = vunpack.c.h.b16 %v539
        %v691 = vunpack.c.l.b16 %v540
        %v692 = vunpack.c.h.b16 %v540
        %v693 = vunpack.c.l.b16 %v541
        %v694 = vunpack.c.h.b16 %v541
        %v695 = vunpack.c.l.b16 %v542
        %v696 = vunpack.c.h.b16 %v542
        %v697 = vunpack.c.l.b16 %v543
        %v698 = vunpack.c.h.b16 %v543
        %v699 = vunpack.c.l.b16 %v544
        %v700 = vunpack.c.h.b16 %v544
        %v701 = vpack.c.b16 %v607, %v605
        %v702 = vpack.c.b16 %v608, %v606
        %v703 = vpack.c.b16 %v611, %v609
        %v704 = vpack.c.b16 %v612, %v610
        %v705 = vpack.c.b16 %v615, %v613
        %v706 = vpack.c.b16 %v616, %v614
        %v707 = vpack.c.b16 %v619, %v617
        %v708 = vpack.c.b16 %v620, %v618
        %v709 = vpack.c.b16 %v623, %v621
        %v710 = vpack.c.b16 %v624, %v622
        %v711 = vpack.c.b16 %v627, %v625
        %v712 = vpack.c.b16 %v628, %v626
        %v713 = vpack.c.b16 %v631, %v629
        %v714 = vpack.c.b16 %v632, %v630
        %v715 = vpack.c.b16 %v635, %v633
        %v716 = vpack.c.b16 %v636, %v634
        %v717 = vpack.c.b16 %v639, %v637
        %v718 = vpack.c.b16 %v640, %v638
        %v719 = vpack.c.b16 %v643, %v641
        %v720 = vpack.c.b16 %v644, %v642
        %v721 = vpack.c.b16 %v647, %v645
        %v722 = vpack.c.b16 %v648, %v646
        %v723 = vpack.c.b16 %v651, %v649
        %v724 = vpack.c.b16 %v652, %v650
        %v725 = vpack.c.b16 %v655, %v653
        %v726 = vpack.c.b16 %v656, %v654
        %v727 = vpack.c.b16 %v659, %v657
        %v728 = vpack.c.b16 %v660, %v658
        %v729 = vpack.c.b16 %v663, %v661
        %v730 = vpack.c.b16 %v664, %v662
        %v731 = vpack.c.b16 %v667, %v665
        %v732 = vpack.c.b16 %v668, %v666
        %v733 = vpack.c.b16 %v671, %v669
        %v734 = vpack.c.b16 %v672, %v670
        %v735 = vpack.c.b16 %v675, %v673
        %v736 = vpack.c.b16 %v676, %v674
        %v737 = vpack.c.b16 %v679, %v677
        %v738 = vpack.c.b16 %v680, %v678
        %v739 = vpack.c.b16 %v683, %v681
        %v740 = vpack.c.b16 %v684, %v682
        %v741 = vpack.c.b16 %v687, %v685
        %v742 = vpack.c.b16 %v688, %v686
        %v743 = vpack.c.b16 %v691, %v689
        %v744 = vpack.c.b16 %v692, %v690
        %v745 = vpack.c.b16 %v695, %v693
        %v746 = vpack.c.b16 %v696, %v694
        %v747 = vpack.c.b16 %v699, %v697
        %v748 = vpack.c.b16 %v700, %v698
        %797 = vmatprep.subr.bf16.mxu0 %v702
        %798 = vmatpush1.bf16.msra.mxu0 %v701
        %799 = vmatprep.subr.bf16.mxu0 %v704
        %800 = vmatpush1.bf16.msra.mxu0 %v703
        %801 = vmatprep.subr.bf16.mxu0 %v706
        %802 = vmatpush1.bf16.msra.mxu0 %v705
        %803 = vmatprep.subr.bf16.mxu0 %v708
        %804 = vmatpush1.bf16.msra.mxu0 %v707
        %805 = vmatprep.subr.bf16.mxu0 %v710
        %806 = vmatpush1.bf16.msra.mxu0 %v709
        %807 = vmatprep.subr.bf16.mxu0 %v712
        %808 = vmatpush1.bf16.msra.mxu0 %v711
        %809 = vmatprep.subr.bf16.mxu0 %v714
        %810 = vmatpush1.bf16.msra.mxu0 %v713
        %811 = vmatprep.subr.bf16.mxu0 %v716
        %812 = vmatpush1.bf16.msra.mxu0 %v715
        %813 = vmatprep.subr.bf16.mxu0 %v718
        %814 = vmatpush1.bf16.msra.mxu0 %v717
        %815 = vmatprep.subr.bf16.mxu0 %v720
        %816 = vmatpush1.bf16.msra.mxu0 %v719
        %817 = vmatprep.subr.bf16.mxu0 %v722
        %818 = vmatpush1.bf16.msra.mxu0 %v721
        %819 = vmatprep.subr.bf16.mxu0 %v724
        %820 = vmatpush1.bf16.msra.mxu0 %v723
        %821 = vmatprep.subr.bf16.mxu0 %v726
        %822 = vmatpush1.bf16.msra.mxu0 %v725
        %823 = vmatprep.subr.bf16.mxu0 %v728
        %824 = vmatpush1.bf16.msra.mxu0 %v727
        %825 = vmatprep.subr.bf16.mxu0 %v730
        %826 = vmatpush1.bf16.msra.mxu0 %v729
        %827 = vmatprep.subr.bf16.mxu0 %v732
        %828 = vmatpush1.bf16.msra.mxu0 %v731
        %829 = vmatprep.mubr.bf16.mxu0 %v495
        %830 = vmatmul.mubr.bf16.gmra.mrb[0].mxu0 %v494
        %v831 = vpop.f32.mrb[0].mxu0
        %v832 = vadd.f32 %v550, %v831
        %v833 = vpop.f32.mrb[0].mxu0
        %v834 = vadd.f32 %v554, %v833
        %v835 = vpop.f32.mrb[0].mxu0
        %v836 = vadd.f32 %v550, %v835
        %v837 = vpop.f32.mrb[0].mxu0
        %v838 = vadd.f32 %v554, %v837
        %839 = vdwg.mxu0
        %840 = vmatprep.subr.bf16.mxu0 %v734
        %841 = vmatpush1.bf16.msra.mxu0 %v733
        %842 = vmatprep.subr.bf16.mxu0 %v736
        %843 = vmatpush1.bf16.msra.mxu0 %v735
        %844 = vmatprep.subr.bf16.mxu0 %v738
        %845 = vmatpush1.bf16.msra.mxu0 %v737
        %846 = vmatprep.subr.bf16.mxu0 %v740
        %847 = vmatpush1.bf16.msra.mxu0 %v739
        %848 = vmatprep.subr.bf16.mxu0 %v742
        %849 = vmatpush1.bf16.msra.mxu0 %v741
        %850 = vmatprep.subr.bf16.mxu0 %v744
        %851 = vmatpush1.bf16.msra.mxu0 %v743
        %852 = vmatprep.subr.bf16.mxu0 %v746
        %853 = vmatpush1.bf16.msra.mxu0 %v745
        %854 = vmatprep.subr.bf16.mxu0 %v748
        %855 = vmatpush1.bf16.msra.mxu0 %v747
        %856 = vmatprep.subr.bf16.mxu0 0
        %857 = vmatpush1.bf16.msra.mxu0 0
        %858 = vmatprep.subr.bf16.mxu0 0
        %859 = vmatpush1.bf16.msra.mxu0 0
        %860 = vmatprep.subr.bf16.mxu0 0
        %861 = vmatpush1.bf16.msra.mxu0 0
        %862 = vmatprep.subr.bf16.mxu0 0
        %863 = vmatpush1.bf16.msra.mxu0 0
        %864 = vmatprep.subr.bf16.mxu0 0
        %865 = vmatpush1.bf16.msra.mxu0 0
        %866 = vmatprep.subr.bf16.mxu0 0
        %867 = vmatpush1.bf16.msra.mxu0 0
        %868 = vmatprep.subr.bf16.mxu0 0
        %869 = vmatpush1.bf16.msra.mxu0 0
        %870 = vmatprep.subr.bf16.mxu0 0
        %871 = vmatpush1.bf16.msra.mxu0 0
        %872 = vmatprep.mubr.bf16.mxu0 0
        %873 = vmatmul.mubr.bf16.gmra.mrb[0].mxu0 %v496
        %v874 = vpop.f32.mrb[0].mxu0
        %v875 = vadd.f32 %v832, %v874
        %v876 = vpop.f32.mrb[0].mxu0
        %v877 = vadd.f32 %v834, %v876
        %v878 = vpop.f32.mrb[0].mxu0
        %v879 = vadd.f32 %v836, %v878
        %v880 = vpop.f32.mrb[0].mxu0
        %v881 = vadd.f32 %v838, %v880
        %882 = vdwg.mxu0
        %v883 = vxor.u32 %v875, 2147483648
        %v884 = vxor.u32 %v877, 2147483648
        %v885 = vxor.u32 %v879, 2147483648
        %v886 = vxor.u32 %v881, 2147483648
        %v887 = vmul.f32 %v883, 1.442695
        %v888 = vpow.pop %v887
        %v889 = vmul.f32 %v884, 1.442695
        %v890 = vpow.pop %v889
        %v891 = vmul.f32 %v885, 1.442695
        %v892 = vpow.pop %v891
        %v893 = vmul.f32 %v886, 1.442695
        %v894 = vpow.pop %v893
        %v895 = vadd.f32 %v888, 1.0
        %v896 = vadd.f32 %v890, 1.0
        %v897 = vadd.f32 %v892, 1.0
        %v898 = vadd.f32 %v894, 1.0
        %v899 = vrcp.pop %v895
        %v900 = vmul.f32 1.0, %v899
        %v901 = vrcp.pop %v896
        %v902 = vmul.f32 1.0, %v901
        %v903 = vrcp.pop %v897
        %v904 = vmul.f32 1.0, %v903
        %v905 = vrcp.pop %v898
        %v906 = vmul.f32 1.0, %v905
        %v907 = vmul.f32 %v875, %v900
        %v908 = vmul.f32 %v877, %v902
        %v909 = vmul.f32 %v879, %v904
        %v910 = vmul.f32 %v881, %v906
        %v911 = vunpack.c.l.bf16 %v276
        %v912 = vunpack.c.h.bf16 %v276
        %v913 = vunpack.c.l.bf16 %v277
        %v914 = vunpack.c.h.bf16 %v277
        %v915 = vadd.f32 %v907, %v911
        %v916 = vadd.f32 %v908, %v912
        %v917 = vadd.f32 %v909, %v913
        %v918 = vadd.f32 %v910, %v914
        %919 = vst [vmem:[%s272] sm:$0xff] %v915
        %920 = vst [vmem:[%s272 + $0x8] sm:$0xff] %v916
        %921 = vst [vmem:[%s272 + $0x10] sm:$0xff] %v917
        %922 = vst [vmem:[%s272 + $0x18] sm:$0xff] %v918
        %s923 = sand.u32 %s141, 1
        %s924 = scalar_lea.sflag [#allocation4], %s923
        %s925 = sand.u32 %s141, 1
        %s926 = smul.addr %s925, 32
        %s927 = scalar_lea.vmem [#allocation8], %s926
        // Predicated region
        $region53: #{tpu_custom_call.1} parent=39 // pred_check
          %p928 = pneg %p151
        $region54: #{tpu_custom_call.1} parent=39 // pred_check_branch
          %930 = sbr.rel (%p928) target = $region56
        $region55: #{tpu_custom_call.1} parent=39 // pred_region
          %s931 = smul.u32 2, %s23
          %s933 = ssub.s32 512, 512
          %934 = vsyncadd %s924, %s933
          %s935 = smul.addr %s931, 2
          %s936 = smul.addr %s935, 128
          %s937 = scalar_lea.hbm %s5, %s936
          %s938 = sshll.u32 %s927, 4
          %s939 = int_to_ptr.vmem [resolvable:$true] %s938
          %944 = dma.vmem_to_hbm [thread:$0]  %s939, 512, %s937, %s924, 256, 256, 16
        $region56: #{tpu_custom_call.1} parent=39 // pred_fallthru
          _
      $region40: #{tpu_custom_call.1} parent=5 // pred_fallthru
        _
      %p945 = scmp.le.s32.totalorder 2, %s18
      // Predicated region
      $region57: #{tpu_custom_call.1} parent=5 // pred_check
        %p946 = pneg %p945
      $region58: #{tpu_custom_call.1} parent=5 // pred_check_branch
        %948 = sbr.rel (%p946) target = $region60
      $region59: #{tpu_custom_call.1} parent=5 // pred_region
        %s949 = ssub.s32 %s18, 2
        // Predicated region
        $region61: #{tpu_custom_call.1} parent=59 // pred_check
          %p950 = pneg %p157
        $region62: #{tpu_custom_call.1} parent=59 // pred_check_branch
          %952 = sbr.rel (%p950) target = $region64
        $region63: #{tpu_custom_call.1} parent=59 // pred_region
          %s953 = sand.u32 %s142, 1
          %s954 = scalar_lea.sflag [#allocation4], %s953
          %s955 = sand.u32 %s142, 1
          %s956 = smul.addr %s955, 32
          %s957 = scalar_lea.vmem [#allocation8], %s956
          %958 = dma.done %s954, 512
        $region64: #{tpu_custom_call.1} parent=59 // pred_fallthru
          _
      $region60: #{tpu_custom_call.1} parent=5 // pred_fallthru
        _
    $region6: #{tpu_custom_call.1} parent=1 // loop_footer
      %s22 = sadd.s32 1, %s18
    $region7: #{tpu_custom_call.1} parent=1 // loop_footer_branch
      %17 = sbr.rel target = $region3
    $region8: #{tpu_custom_call.1} parent=1 // loop_exit
      _
    %959 = vsyncpa [#allocation3], 1
    %s960 = scalar_lea.sflag [#allocation3], 1
    %961 = vsyncpa %s960, 1
    %962 = vsyncpa [#allocation6], 1
    %963 = vsyncpa [#allocation4], 1
    %s964 = scalar_lea.sflag [#allocation4], 1
    %965 = vsyncpa %s964, 1

// kernel: tpu_custom_call.1
$region0: #{tpu_custom_call.1}
  #allocation0 [shape = 'u32[]', space=smem, size = 0x4, offset = 0x4, fixed_abs, tag = 'smem constant byte address 0x4 - core index']
  #allocation1 [shape = 'u32[144,128]{1,0:T(1,128)}', space=vmem, size = 0x12000, scoped, tag = 'internal scratch']
  %s0 = inlined_call_operand.hbm [shape: bf16[32,256], index: 0, kind: input, shape index: {}]
  %s1 = inlined_call_operand.hbm [shape: bf16[256,128], index: 1, kind: input, shape index: {}]
  %s2 = inlined_call_operand.vmem [shape: f32[1,128], index: 2, kind: input, shape index: {}]
  %s3 = inlined_call_operand.hbm [shape: bf16[384,256], index: 3, kind: input, shape index: {}]
  %s4 = inlined_call_operand.vmem [shape: f32[1,256], index: 4, kind: input, shape index: {}]
  %s5 = inlined_call_operand.hbm [shape: f32[32,256], index: 5, kind: output, shape index: {}]
  %s6 = sld [smem:[#allocation0]]
  $region65: #{tpu_custom_call.1} parent=0
    _
  %s8 = ssub.s32 1, %s6
  %s9 = scalar_select 0, %s8, %s6
  $region1: #{tpu_custom_call.1} parent=0
    #allocation2 [shape = 'u8[16384]{0}', space=vmem, size = 0x4000, scoped, tag = 'input window, operand 0']
    #allocation3 [shape = 's32[2]{0}', space=sflag, size = 0x8, scoped, tag = 'scoped memory for tpu_custom_call.1']
    #allocation4 [shape = 's32[2]{0}', space=sflag, size = 0x8, scoped, tag = 'scoped memory for tpu_custom_call.1']
    #allocation5 [shape = 'u8[65536]{0}', space=vmem, size = 0x10000, scoped, tag = 'input window, operand 1, single buffered']
    #allocation6 [shape = 's32[1]{0}', space=sflag, size = 0x4, scoped, tag = 'scoped memory for tpu_custom_call.1']
    #allocation7 [shape = 'u8[196608]{0}', space=vmem, size = 0x30000, scoped, tag = 'input window, operand 3, single buffered']
    #allocation8 [shape = 'u8[32768]{0}', space=vmem, size = 0x8000, scoped, tag = 'output window, operand 0']
    %10 = vsyncpa [#allocation3], 0
    %s11 = scalar_lea.sflag [#allocation3], 1
    %12 = vsyncpa %s11, 0
    %13 = vsyncpa [#allocation6], 0
    %14 = vsyncpa [#allocation4], 0
    %s15 = scalar_lea.sflag [#allocation4], 1
    %16 = vsyncpa %s15, 0
    loop: start=0, step=1, limit=4
    $region2: #{tpu_custom_call.1} parent=1 // loop_pre_header
      _
    $region3: #{tpu_custom_call.1} parent=1 // loop_header
      %s18 = sphi 0, %s22
      %p19 = scmp.ge.s32.totalorder %s18, 4
      %s28 = sphi 0, %s30
      %s31 = sphi 0, %s28
      %s32 = sphi 0, %s31
      %s48 = sphi 0, %s32
      %s52 = sphi 0, %s52
      %s54 = sphi 0, %s52
      %s55 = sphi 0, %s54
      %s69 = sphi 0, %s55
      %s73 = sphi 0, %s73
      %s75 = sphi 0, %s73
      %s76 = sphi 0, %s75
      %s90 = sphi 0, %s76
      %s94 = sphi 0, %s94
      %s96 = sphi 0, %s94
      %s97 = sphi 0, %s96
      %s111 = sphi 0, %s97
      %s115 = sphi 0, %s115
      %s117 = sphi 0, %s115
      %s118 = sphi 0, %s117
      %s132 = sphi 0, %s118
      %s138 = sphi 0, %s140
      %s141 = sphi 0, %s138
      %s142 = sphi 0, %s141
      %s158 = sphi 0, %s142
    $region4: #{tpu_custom_call.1} parent=1 // loop_header_branch
      %21 = sbr.rel (%p19) target = $region8
    $region5: #{tpu_custom_call.1} parent=1 // loop_body
      %s23 = ssub.s32 %s18, 1
      %s24 = ssub.s32 %s18, 2
      %s25 = sadd.s32 %s18, 1
      %s26 = ssub.s32 %s18, %s25
      %p27 = scmp.eq.s32.totalorder %s26, 0
      %s29 = sadd.s32 %s28, 1
      %s30 = scalar_select %p27, %s28, %s29
      %p33 = pneg %p27
      %p34 = scmp.eq.s32.totalorder %s18, 1
      %p35 = por %p33, %p34
      %p36 = scmp.ne.s32.totalorder %s28, %s31
      %p37 = scmp.eq.s32.totalorder %s18, 0
      %p38 = por %p36, %p37
      %p39 = scmp.ne.s32.totalorder %s28, %s31
      %p40 = scmp.eq.s32.totalorder %s23, 1
      %p41 = por %p39, %p40
      %p42 = scmp.ne.s32.totalorder %s31, %s32
      %p43 = scmp.eq.s32.totalorder %s23, 0
      %p44 = por %p42, %p43
      %p45 = scmp.ne.s32.totalorder %s31, %s32
      %p46 = scmp.eq.s32.totalorder %s24, 1
      %p47 = por %p45, %p46
      %p49 = scmp.ne.s32.totalorder %s32, %s48
      %p50 = scmp.eq.s32.totalorder %s24, 0
      %p51 = por %p49, %p50
      %s53 = sadd.s32 %s52, 1
      %p56 = scmp.eq.s32.totalorder %s18, 1
      %p57 = scmp.ne.s32.totalorder %s52, %s54
      %p58 = scmp.eq.s32.totalorder %s18, 0
      %p59 = por %p57, %p58
      %p60 = scmp.ne.s32.totalorder %s52, %s54
      %p61 = scmp.eq.s32.totalorder %s23, 1
      %p62 = por %p60, %p61
      %p63 = scmp.ne.s32.totalorder %s54, %s55
      %p64 = scmp.eq.s32.totalorder %s23, 0
      %p65 = por %p63, %p64
      %p66 = scmp.ne.s32.totalorder %s54, %s55
      %p67 = scmp.eq.s32.totalorder %s24, 1
      %p68 = por %p66, %p67
      %p70 = scmp.ne.s32.totalorder %s55, %s69
      %p71 = scmp.eq.s32.totalorder %s24, 0
      %p72 = por %p70, %p71
      %s74 = sadd.s32 %s73, 1
      %p77 = scmp.eq.s32.totalorder %s18, 1
      %p78 = scmp.ne.s32.totalorder %s73, %s75
      %p79 = scmp.eq.s32.totalorder %s18, 0
      %p80 = por %p78, %p79
      %p81 = scmp.ne.s32.totalorder %s73, %s75
      %p82 = scmp.eq.s32.totalorder %s23, 1
      %p83 = por %p81, %p82
      %p84 = scmp.ne.s32.totalorder %s75, %s76
      %p85 = scmp.eq.s32.totalorder %s23, 0
      %p86 = por %p84, %p85
      %p87 = scmp.ne.s32.totalorder %s75, %s76
      %p88 = scmp.eq.s32.totalorder %s24, 1
      %p89 = por %p87, %p88
      %p91 = scmp.ne.s32.totalorder %s76, %s90
      %p92 = scmp.eq.s32.totalorder %s24, 0
      %p93 = por %p91, %p92
      %s95 = sadd.s32 %s94, 1
      %p98 = scmp.eq.s32.totalorder %s18, 1
      %p99 = scmp.ne.s32.totalorder %s94, %s96
      %p100 = scmp.eq.s32.totalorder %s18, 0
      %p101 = por %p99, %p100
      %p102 = scmp.ne.s32.totalorder %s94, %s96
      %p103 = scmp.eq.s32.totalorder %s23, 1
      %p104 = por %p102, %p103
      %p105 = scmp.ne.s32.totalorder %s96, %s97
      %p106 = scmp.eq.s32.totalorder %s23, 0
      %p107 = por %p105, %p106
      %p108 = scmp.ne.s32.totalorder %s96, %s97
      %p109 = scmp.eq.s32.totalorder %s24, 1
      %p110 = por %p108, %p109
      %p112 = scmp.ne.s32.totalorder %s97, %s111
      %p113 = scmp.eq.s32.totalorder %s24, 0
      %p114 = por %p112, %p113
      %s116 = sadd.s32 %s115, 1
      %p119 = scmp.eq.s32.totalorder %s18, 1
      %p120 = scmp.ne.s32.totalorder %s115, %s117
      %p121 = scmp.eq.s32.totalorder %s18, 0
      %p122 = por %p120, %p121
      %p123 = scmp.ne.s32.totalorder %s115, %s117
      %p124 = scmp.eq.s32.totalorder %s23, 1
      %p125 = por %p123, %p124
      %p126 = scmp.ne.s32.totalorder %s117, %s118
      %p127 = scmp.eq.s32.totalorder %s23, 0
      %p128 = por %p126, %p127
      %p129 = scmp.ne.s32.totalorder %s117, %s118
      %p130 = scmp.eq.s32.totalorder %s24, 1
      %p131 = por %p129, %p130
      %p133 = scmp.ne.s32.totalorder %s118, %s132
      %p134 = scmp.eq.s32.totalorder %s24, 0
      %p135 = por %p133, %p134
      %s136 = ssub.s32 %s18, %s25
      %p137 = scmp.eq.s32.totalorder %s136, 0
      %s139 = sadd.s32 %s138, 1
      %s140 = scalar_select %p137, %s138, %s139
      %p143 = pneg %p137
      %p144 = scmp.eq.s32.totalorder %s18, 1
      %p145 = por %p143, %p144
      %p146 = scmp.ne.s32.totalorder %s138, %s141
      %p147 = scmp.eq.s32.totalorder %s18, 0
      %p148 = por %p146, %p147
      %p149 = scmp.ne.s32.totalorder %s138, %s141
      %p150 = scmp.eq.s32.totalorder %s23, 1
      %p151 = por %p149, %p150
      %p152 = scmp.ne.s32.totalorder %s141, %s142
      %p153 = scmp.eq.s32.totalorder %s23, 0
      %p154 = por %p152, %p153
      %p155 = scmp.ne.s32.totalorder %s141, %s142
      %p156 = scmp.eq.s32.totalorder %s24, 1
      %p157 = por %p155, %p156
      %p159 = scmp.ne.s32.totalorder %s142, %s158
      %p160 = scmp.eq.s32.totalorder %s24, 0
      %p161 = por %p159, %p160
      %p162 = scmp.le.s32.totalorder 1, %s18
      %p163 = scmp.lt.s32.totalorder %s18, 3
      %p164 = pnand %p162, %p163
      %p165 = pneg %p164
      // Predicated region
      $region9: #{tpu_custom_call.1} parent=5 // pred_check
        _
      $region10: #{tpu_custom_call.1} parent=5 // pred_check_branch
        %167 = sbr.rel (%p164) target = $region12
      $region11: #{tpu_custom_call.1} parent=5 // pred_region
        %s168 = ssub.s32 %s18, 1
        // Predicated region
        $region13: #{tpu_custom_call.1} parent=11 // pred_check
          %p169 = pneg %p65
        $region14: #{tpu_custom_call.1} parent=11 // pred_check_branch
          %171 = sbr.rel (%p169) target = $region16
        $region15: #{tpu_custom_call.1} parent=11 // pred_region
          %s173 = ssub.s32 2048, 2048
          %174 = vsyncadd [#allocation6], %s173
          %s175 = sshll.u32 [#allocation5], 4
          %s176 = int_to_ptr.vmem [resolvable:$true] %s175
          %181 = dma.hbm_to_vmem [thread:$0]  %s1, 2048, %s176, [#allocation6], 64, 64, 4
        $region16: #{tpu_custom_call.1} parent=11 // pred_fallthru
          _
        // Predicated region
        $region17: #{tpu_custom_call.1} parent=11 // pred_check
          %p182 = pneg %p86
        $region18: #{tpu_custom_call.1} parent=11 // pred_check_branch
          %184 = sbr.rel (%p182) target = $region20
        $region19: #{tpu_custom_call.1} parent=11 // pred_region
          _
        $region20: #{tpu_custom_call.1} parent=11 // pred_fallthru
          _
        // Predicated region
        $region21: #{tpu_custom_call.1} parent=11 // pred_check
          %p185 = pneg %p107
        $region22: #{tpu_custom_call.1} parent=11 // pred_check_branch
          %187 = sbr.rel (%p185) target = $region24
        $region23: #{tpu_custom_call.1} parent=11 // pred_region
          %s189 = ssub.s32 6144, 6144
          %190 = vsyncadd [#allocation6], %s189
          %s191 = sshll.u32 [#allocation7], 4
          %s192 = int_to_ptr.vmem [resolvable:$true] %s191
          %197 = dma.hbm_to_vmem [thread:$0]  %s3, 6144, %s192, [#allocation6], 128, 128, 8
        $region24: #{tpu_custom_call.1} parent=11 // pred_fallthru
          _
        // Predicated region
        $region25: #{tpu_custom_call.1} parent=11 // pred_check
          %p198 = pneg %p128
        $region26: #{tpu_custom_call.1} parent=11 // pred_check_branch
          %200 = sbr.rel (%p198) target = $region28
        $region27: #{tpu_custom_call.1} parent=11 // pred_region
          _
        $region28: #{tpu_custom_call.1} parent=11 // pred_fallthru
          _
      $region12: #{tpu_custom_call.1} parent=5 // pred_fallthru
        _
      %p201 = scmp.lt.s32.totalorder %s18, 2
      // Predicated region
      $region29: #{tpu_custom_call.1} parent=5 // pred_check
        %p202 = pneg %p201
      $region30: #{tpu_custom_call.1} parent=5 // pred_check_branch
        %204 = sbr.rel (%p202) target = $region32
      $region31: #{tpu_custom_call.1} parent=5 // pred_region
        // Predicated region
        $region33: #{tpu_custom_call.1} parent=31 // pred_check
          %p205 = pneg %p38
        $region34: #{tpu_custom_call.1} parent=31 // pred_check_branch
          %207 = sbr.rel (%p205) target = $region36
        $region35: #{tpu_custom_call.1} parent=31 // pred_region
          %s208 = sand.u32 %s28, 1
          %s209 = scalar_lea.sflag [#allocation3], %s208
          %s210 = sand.u32 %s28, 1
          %s211 = smul.addr %s210, 16
          %s212 = scalar_lea.vmem [#allocation2], %s211
          %s213 = smul.u32 2, %s18
          %s215 = ssub.s32 256, 256
          %216 = vsyncadd %s209, %s215
          %s217 = smul.addr %s213, 2
          %s218 = smul.addr %s217, 64
          %s219 = scalar_lea.hbm %s0, %s218
          %s220 = sshll.u32 %s212, 4
          %s221 = int_to_ptr.vmem [resolvable:$true] %s220
          %226 = dma.hbm_to_vmem [thread:$0]  %s219, 256, %s221, %s209, 128, 128, 8
        $region36: #{tpu_custom_call.1} parent=31 // pred_fallthru
          _
      $region32: #{tpu_custom_call.1} parent=5 // pred_fallthru
        _
      %p227 = scmp.le.s32.totalorder 1, %s18
      %p228 = scmp.lt.s32.totalorder %s18, 3
      %p229 = pnand %p227, %p228
      %p230 = pneg %p229
      // Predicated region
      $region37: #{tpu_custom_call.1} parent=5 // pred_check
        _
      $region38: #{tpu_custom_call.1} parent=5 // pred_check_branch
        %232 = sbr.rel (%p229) target = $region40
      $region39: #{tpu_custom_call.1} parent=5 // pred_region
        %s233 = ssub.s32 %s18, 1
        %s234 = sand.u32 %s31, 1
        %s235 = scalar_lea.sflag [#allocation3], %s234
        %s236 = sand.u32 %s31, 1
        %s237 = smul.addr %s236, 16
        %s238 = scalar_lea.vmem [#allocation2], %s237
        // Predicated region
        $region41: #{tpu_custom_call.1} parent=39 // pred_check
          %p239 = pneg %p44
        $region42: #{tpu_custom_call.1} parent=39 // pred_check_branch
          %241 = sbr.rel (%p239) target = $region44
        $region43: #{tpu_custom_call.1} parent=39 // pred_region
          %242 = dma.done %s235, 256
        $region44: #{tpu_custom_call.1} parent=39 // pred_fallthru
          _
        // Predicated region
        $region45: #{tpu_custom_call.1} parent=39 // pred_check
          %p243 = pneg %p65
        $region46: #{tpu_custom_call.1} parent=39 // pred_check_branch
          %245 = sbr.rel (%p243) target = $region48
        $region47: #{tpu_custom_call.1} parent=39 // pred_region
          %246 = dma.done [#allocation6], 2048
        $region48: #{tpu_custom_call.1} parent=39 // pred_fallthru
          _
        // Predicated region
        $region49: #{tpu_custom_call.1} parent=39 // pred_check
          %p247 = pneg %p107
        $region50: #{tpu_custom_call.1} parent=39 // pred_check_branch
          %249 = sbr.rel (%p247) target = $region52
        $region51: #{tpu_custom_call.1} parent=39 // pred_region
          %250 = dma.done [#allocation6], 6144
        $region52: #{tpu_custom_call.1} parent=39 // pred_fallthru
          _
        %s251 = sand.u32 %s31, 1
        %s252 = scalar_lea.sflag [#allocation3], %s251
        %s253 = sand.u32 %s31, 1
        %s254 = smul.addr %s253, 16
        %s255 = scalar_lea.vmem [#allocation2], %s254
        %p256 = pneg %p44
        %p257 = pneg %p41
        %p258 = pneg %p65
        %p259 = pneg %p62
        %p260 = pneg %p86
        %p261 = pneg %p83
        %p262 = pneg %p107
        %p263 = pneg %p104
        %p264 = pneg %p128
        %p265 = pneg %p125
        %p266 = pneg %p154
        %p267 = pneg %p151
        %s268 = sand.u32 %s141, 1
        %s269 = scalar_lea.sflag [#allocation4], %s268
        %s270 = sand.u32 %s141, 1
        %s271 = smul.addr %s270, 32
        %s272 = scalar_lea.vmem [#allocation8], %s271
        %s273 = smul.u32 2, %s23
        %s274 = smul.u32 2, %s23
        %v276 = vld [vmem:[%s238] sm:$0xff]
        %v277 = vld [vmem:[%s238 + $0x8] sm:$0xff]
        %v278 = vld [vmem:[#allocation5] sm:$0xf]
        %v279 = vld [vmem:[#allocation5 + $0x4] sm:$0xf]
        %v280 = vld [vmem:[#allocation5 + $0x8] sm:$0xf]
        %v281 = vld [vmem:[#allocation5 + $0xc] sm:$0xf]
        %v282 = vld [vmem:[#allocation5 + $0x10] sm:$0xf]
        %v283 = vld [vmem:[#allocation5 + $0x14] sm:$0xf]
        %v284 = vld [vmem:[#allocation5 + $0x18] sm:$0xf]
        %v285 = vld [vmem:[#allocation5 + $0x1c] sm:$0xf]
        %v286 = vld [vmem:[#allocation5 + $0x20] sm:$0xf]
        %v287 = vld [vmem:[#allocation5 + $0x24] sm:$0xf]
        %v288 = vld [vmem:[#allocation5 + $0x28] sm:$0xf]
        %v289 = vld [vmem:[#allocation5 + $0x2c] sm:$0xf]
        %v290 = vld [vmem:[#allocation5 + $0x30] sm:$0xf]
        %v291 = vld [vmem:[#allocation5 + $0x34] sm:$0xf]
        %v292 = vld [vmem:[#allocation5 + $0x38] sm:$0xf]
        %v293 = vld [vmem:[#allocation5 + $0x3c] sm:$0xf]
        %v294 = vld [vmem:[#allocation5 + $0x40] sm:$0xf]
        %v295 = vld [vmem:[#allocation5 + $0x44] sm:$0xf]
        %v296 = vld [vmem:[#allocation5 + $0x48] sm:$0xf]
        %v297 = vld [vmem:[#allocation5 + $0x4c] sm:$0xf]
        %v298 = vld [vmem:[#allocation5 + $0x50] sm:$0xf]
        %v299 = vld [vmem:[#allocation5 + $0x54] sm:$0xf]
        %v300 = vld [vmem:[#allocation5 + $0x58] sm:$0xf]
        %v301 = vld [vmem:[#allocation5 + $0x5c] sm:$0xf]
        %v302 = vld [vmem:[#allocation5 + $0x60] sm:$0xf]
        %v303 = vld [vmem:[#allocation5 + $0x64] sm:$0xf]
        %v304 = vld [vmem:[#allocation5 + $0x68] sm:$0xf]
        %v305 = vld [vmem:[#allocation5 + $0x6c] sm:$0xf]
        %v306 = vld [vmem:[#allocation5 + $0x70] sm:$0xf]
        %v307 = vld [vmem:[#allocation5 + $0x74] sm:$0xf]
        %v308 = vld [vmem:[#allocation5 + $0x78] sm:$0xf]
        %v309 = vld [vmem:[#allocation5 + $0x7c] sm:$0xf]
        %v310 = vld [vmem:[%s2] sm:$0x1]
        %v312 = vlaneseq
        %v313 = vshrl.u32 %v312, 7
        %v314 = vsub.s32 0, %v313
        %v315 = vrot.slane %v310, %v314
        %v319 = vunpack.c.l.b16 %v276
        %v320 = vunpack.c.h.b16 %v276
        %v321 = vunpack.c.l.b16 %v277
        %v322 = vunpack.c.h.b16 %v277
        %v323 = vpack.c.b16 %v321, %v319
        %v324 = vpack.c.b16 %v322, %v320
        %v359 = vunpack.c.l.b16 %v278
        %v360 = vunpack.c.l.b16 %v279
        %v361 = vunpack.c.l.b16 %v280
        %v362 = vunpack.c.l.b16 %v281
        %v363 = vunpack.c.l.b16 %v282
        %v364 = vunpack.c.l.b16 %v283
        %v365 = vunpack.c.l.b16 %v284
        %v366 = vunpack.c.l.b16 %v285
        %v367 = vunpack.c.l.b16 %v286
        %v368 = vunpack.c.l.b16 %v287
        %v369 = vunpack.c.l.b16 %v288
        %v370 = vunpack.c.l.b16 %v289
        %v371 = vunpack.c.l.b16 %v290
        %v372 = vunpack.c.l.b16 %v291
        %v373 = vunpack.c.l.b16 %v292
        %v374 = vunpack.c.l.b16 %v293
        %v375 = vunpack.c.l.b16 %v294
        %v376 = vunpack.c.l.b16 %v295
        %v377 = vunpack.c.l.b16 %v296
        %v378 = vunpack.c.l.b16 %v297
        %v379 = vunpack.c.l.b16 %v298
        %v380 = vunpack.c.l.b16 %v299
        %v381 = vunpack.c.l.b16 %v300
        %v382 = vunpack.c.l.b16 %v301
        %v383 = vunpack.c.l.b16 %v302
        %v384 = vunpack.c.l.b16 %v303
        %v385 = vunpack.c.l.b16 %v304
        %v386 = vunpack.c.l.b16 %v305
        %v387 = vunpack.c.l.b16 %v306
        %v388 = vunpack.c.l.b16 %v307
        %v389 = vunpack.c.l.b16 %v308
        %v390 = vunpack.c.l.b16 %v309
        %v391 = vpack.c.b16 %v360, %v359
        %v392 = vpack.c.b16 %v362, %v361
        %v393 = vpack.c.b16 %v364, %v363
        %v394 = vpack.c.b16 %v366, %v365
        %v395 = vpack.c.b16 %v368, %v367
        %v396 = vpack.c.b16 %v370, %v369
        %v397 = vpack.c.b16 %v372, %v371
        %v398 = vpack.c.b16 %v374, %v373
        %v399 = vpack.c.b16 %v376, %v375
        %v400 = vpack.c.b16 %v378, %v377
        %v401 = vpack.c.b16 %v380, %v379
        %v402 = vpack.c.b16 %v382, %v381
        %v403 = vpack.c.b16 %v384, %v383
        %v404 = vpack.c.b16 %v386, %v385
        %v405 = vpack.c.b16 %v388, %v387
        %v406 = vpack.c.b16 %v390, %v389
        %423 = vmatprep.subr.bf16.mxu0 0
        %424 = vmatpush1.bf16.msra.mxu0 %v391
        %425 = vmatprep.subr.bf16.mxu0 0
        %426 = vmatpush1.bf16.msra.mxu0 %v392
        %427 = vmatprep.subr.bf16.mxu0 0
        %428 = vmatpush1.bf16.msra.mxu0 %v393
        %429 = vmatprep.subr.bf16.mxu0 0
        %430 = vmatpush1.bf16.msra.mxu0 %v394
        %431 = vmatprep.subr.bf16.mxu0 0
        %432 = vmatpush1.bf16.msra.mxu0 %v395
        %433 = vmatprep.subr.bf16.mxu0 0
        %434 = vmatpush1.bf16.msra.mxu0 %v396
        %435 = vmatprep.subr.bf16.mxu0 0
        %436 = vmatpush1.bf16.msra.mxu0 %v397
        %437 = vmatprep.subr.bf16.mxu0 0
        %438 = vmatpush1.bf16.msra.mxu0 %v398
        %439 = vmatprep.subr.bf16.mxu0 0
        %440 = vmatpush1.bf16.msra.mxu0 %v399
        %441 = vmatprep.subr.bf16.mxu0 0
        %442 = vmatpush1.bf16.msra.mxu0 %v400
        %443 = vmatprep.subr.bf16.mxu0 0
        %444 = vmatpush1.bf16.msra.mxu0 %v401
        %445 = vmatprep.subr.bf16.mxu0 0
        %446 = vmatpush1.bf16.msra.mxu0 %v402
        %447 = vmatprep.subr.bf16.mxu0 0
        %448 = vmatpush1.bf16.msra.mxu0 %v403
        %449 = vmatprep.subr.bf16.mxu0 0
        %450 = vmatpush1.bf16.msra.mxu0 %v404
        %451 = vmatprep.subr.bf16.mxu0 0
        %452 = vmatpush1.bf16.msra.mxu0 %v405
        %453 = vmatprep.subr.bf16.mxu0 0
        %454 = vmatpush1.bf16.msra.mxu0 %v406
        %455 = vmatprep.mubr.bf16.mxu0 %v324
        %456 = vmatmul.mubr.bf16.gmra.mrb[0].mxu0 %v323
        %v457 = vpop.f32.mrb[0].mxu0
        %v458 = vadd.f32 %v315, %v457
        %v459 = vpop.f32.mrb[0].mxu0
        %v460 = vpop.f32.mrb[0].mxu0
        %v461 = vadd.f32 %v315, %v460
        %v462 = vpop.f32.mrb[0].mxu0
        %463 = vdwg.mxu0
        %v464 = vxor.u32 %v458, 2147483648
        %v465 = vxor.u32 %v461, 2147483648
        %v466 = vmul.f32 %v464, 1.442695
        %v467 = vpow.pop %v466
        %v468 = vmul.f32 %v465, 1.442695
        %v469 = vpow.pop %v468
        %v470 = vadd.f32 %v467, 1.0
        %v471 = vadd.f32 %v469, 1.0
        %v472 = vrcp.pop %v470
        %v473 = vmul.f32 1.0, %v472
        %v474 = vrcp.pop %v471
        %v475 = vmul.f32 1.0, %v474
        %v476 = vmul.f32 %v458, %v473
        %v477 = vmul.f32 %v461, %v475
        %vm480 = vcmask 1040384
        %v481 = vrot.slane %v476, 7
        %v482 = vrot.slane %v477, 7
        %v483 = vsel %vm480, %v481, %v482
        %v486 = vsel %vm480, 0.0, %v481
        %vm487 = vcmask 1046528
        %v488 = vrot.slane %v476, 1
        %v489 = vrot.slane %v477, 1
        %v490 = vsel %vm487, %v488, %v489
        %v493 = vsel %vm487, %v489, 0.0
        %v494 = vpack.c.bf16 %v483, %v486
        %v495 = vpack.c.bf16 %v477, %v476
        %v496 = vpack.c.bf16 %v493, %v490
        %v497 = vld [vmem:[#allocation7] sm:$0xff]
        %v498 = vld [vmem:[#allocation7 + $0x8] sm:$0xff]
        %v499 = vld [vmem:[#allocation7 + $0x10] sm:$0xff]
        %v500 = vld [vmem:[#allocation7 + $0x18] sm:$0xff]
        %v501 = vld [vmem:[#allocation7 + $0x20] sm:$0xff]
        %v502 = vld [vmem:[#allocation7 + $0x28] sm:$0xff]
        %v503 = vld [vmem:[#allocation7 + $0x30] sm:$0xff]
        %v504 = vld [vmem:[#allocation7 + $0x38] sm:$0xff]
        %v505 = vld [vmem:[#allocation7 + $0x40] sm:$0xff]
        %v506 = vld [vmem:[#allocation7 + $0x48] sm:$0xff]
        %v507 = vld [vmem:[#allocation7 + $0x50] sm:$0xff]
        %v508 = vld [vmem:[#allocation7 + $0x58] sm:$0xff]
        %v509 = vld [vmem:[#allocation7 + $0x60] sm:$0xff]
        %v510 = vld [vmem:[#allocation7 + $0x68] sm:$0xff]
        %v511 = vld [vmem:[#allocation7 + $0x70] sm:$0xff]
        %v512 = vld [vmem:[#allocation7 + $0x78] sm:$0xff]
        %v513 = vld [vmem:[#allocation7 + $0x80] sm:$0xff]
        %v514 = vld [vmem:[#allocation7 + $0x88] sm:$0xff]
        %v515 = vld [vmem:[#allocation7 + $0x90] sm:$0xff]
        %v516 = vld [vmem:[#allocation7 + $0x98] sm:$0xff]
        %v517 = vld [vmem:[#allocation7 + $0xa0] sm:$0xff]
        %v518 = vld [vmem:[#allocation7 + $0xa8] sm:$0xff]
        %v519 = vld [vmem:[#allocation7 + $0xb0] sm:$0xff]
        %v520 = vld [vmem:[#allocation7 + $0xb8] sm:$0xff]
        %v521 = vld [vmem:[#allocation7 + $0xc0] sm:$0xff]
        %v522 = vld [vmem:[#allocation7 + $0xc8] sm:$0xff]
        %v523 = vld [vmem:[#allocation7 + $0xd0] sm:$0xff]
        %v524 = vld [vmem:[#allocation7 + $0xd8] sm:$0xff]
        %v525 = vld [vmem:[#allocation7 + $0xe0] sm:$0xff]
        %v526 = vld [vmem:[#allocation7 + $0xe8] sm:$0xff]
        %v527 = vld [vmem:[#allocation7 + $0xf0] sm:$0xff]
        %v528 = vld [vmem:[#allocation7 + $0xf8] sm:$0xff]
        %v529 = vld [vmem:[#allocation7 + $0x100] sm:$0xff]
        %v530 = vld [vmem:[#allocation7 + $0x108] sm:$0xff]
        %v531 = vld [vmem:[#allocation7 + $0x110] sm:$0xff]
        %v532 = vld [vmem:[#allocation7 + $0x118] sm:$0xff]
        %v533 = vld [vmem:[#allocation7 + $0x120] sm:$0xff]
        %v534 = vld [vmem:[#allocation7 + $0x128] sm:$0xff]
        %v535 = vld [vmem:[#allocation7 + $0x130] sm:$0xff]
        %v536 = vld [vmem:[#allocation7 + $0x138] sm:$0xff]
        %v537 = vld [vmem:[#allocation7 + $0x140] sm:$0xff]
        %v538 = vld [vmem:[#allocation7 + $0x148] sm:$0xff]
        %v539 = vld [vmem:[#allocation7 + $0x150] sm:$0xff]
        %v540 = vld [vmem:[#allocation7 + $0x158] sm:$0xff]
        %v541 = vld [vmem:[#allocation7 + $0x160] sm:$0xff]
        %v542 = vld [vmem:[#allocation7 + $0x168] sm:$0xff]
        %v543 = vld [vmem:[#allocation7 + $0x170] sm:$0xff]
        %v544 = vld [vmem:[#allocation7 + $0x178] sm:$0xff]
        %v545 = vld [vmem:[%s4] sm:$0x3]
        %v547 = vlaneseq
        %v548 = vshrl.u32 %v547, 7
        %v549 = vsub.s32 0, %v548
        %v550 = vrot.slane %v545, %v549
        %v551 = vlaneseq
        %v552 = vshrl.u32 %v551, 7
        %v553 = vsub.s32 1, %v552
        %v554 = vrot.slane %v545, %v553
        %v605 = vunpack.c.l.b16 %v497
        %v606 = vunpack.c.h.b16 %v497
        %v607 = vunpack.c.l.b16 %v498
        %v608 = vunpack.c.h.b16 %v498
        %v609 = vunpack.c.l.b16 %v499
        %v610 = vunpack.c.h.b16 %v499
        %v611 = vunpack.c.l.b16 %v500
        %v612 = vunpack.c.h.b16 %v500
        %v613 = vunpack.c.l.b16 %v501
        %v614 = vunpack.c.h.b16 %v501
        %v615 = vunpack.c.l.b16 %v502
        %v616 = vunpack.c.h.b16 %v502
        %v617 = vunpack.c.l.b16 %v503
        %v618 = vunpack.c.h.b16 %v503
        %v619 = vunpack.c.l.b16 %v504
        %v620 = vunpack.c.h.b16 %v504
        %v621 = vunpack.c.l.b16 %v505
        %v622 = vunpack.c.h.b16 %v505
        %v623 = vunpack.c.l.b16 %v506
        %v624 = vunpack.c.h.b16 %v506
        %v625 = vunpack.c.l.b16 %v507
        %v626 = vunpack.c.h.b16 %v507
        %v627 = vunpack.c.l.b16 %v508
        %v628 = vunpack.c.h.b16 %v508
        %v629 = vunpack.c.l.b16 %v509
        %v630 = vunpack.c.h.b16 %v509
        %v631 = vunpack.c.l.b16 %v510
        %v632 = vunpack.c.h.b16 %v510
        %v633 = vunpack.c.l.b16 %v511
        %v634 = vunpack.c.h.b16 %v511
        %v635 = vunpack.c.l.b16 %v512
        %v636 = vunpack.c.h.b16 %v512
        %v637 = vunpack.c.l.b16 %v513
        %v638 = vunpack.c.h.b16 %v513
        %v639 = vunpack.c.l.b16 %v514
        %v640 = vunpack.c.h.b16 %v514
        %v641 = vunpack.c.l.b16 %v515
        %v642 = vunpack.c.h.b16 %v515
        %v643 = vunpack.c.l.b16 %v516
        %v644 = vunpack.c.h.b16 %v516
        %v645 = vunpack.c.l.b16 %v517
        %v646 = vunpack.c.h.b16 %v517
        %v647 = vunpack.c.l.b16 %v518
        %v648 = vunpack.c.h.b16 %v518
        %v649 = vunpack.c.l.b16 %v519
        %v650 = vunpack.c.h.b16 %v519
        %v651 = vunpack.c.l.b16 %v520
        %v652 = vunpack.c.h.b16 %v520
        %v653 = vunpack.c.l.b16 %v521
        %v654 = vunpack.c.h.b16 %v521
        %v655 = vunpack.c.l.b16 %v522
        %v656 = vunpack.c.h.b16 %v522
        %v657 = vunpack.c.l.b16 %v523
        %v658 = vunpack.c.h.b16 %v523
        %v659 = vunpack.c.l.b16 %v524
        %v660 = vunpack.c.h.b16 %v524
        %v661 = vunpack.c.l.b16 %v525
        %v662 = vunpack.c.h.b16 %v525
        %v663 = vunpack.c.l.b16 %v526
        %v664 = vunpack.c.h.b16 %v526
        %v665 = vunpack.c.l.b16 %v527
        %v666 = vunpack.c.h.b16 %v527
        %v667 = vunpack.c.l.b16 %v528
        %v668 = vunpack.c.h.b16 %v528
        %v669 = vunpack.c.l.b16 %v529
        %v670 = vunpack.c.h.b16 %v529
        %v671 = vunpack.c.l.b16 %v530
        %v672 = vunpack.c.h.b16 %v530
        %v673 = vunpack.c.l.b16 %v531
        %v674 = vunpack.c.h.b16 %v531
        %v675 = vunpack.c.l.b16 %v532
        %v676 = vunpack.c.h.b16 %v532
        %v677 = vunpack.c.l.b16 %v533
        %v678 = vunpack.c.h.b16 %v533
        %v679 = vunpack.c.l.b16 %v534
        %v680 = vunpack.c.h.b16 %v534
        %v681 = vunpack.c.l.b16 %v535
        %v682 = vunpack.c.h.b16 %v535
        %v683 = vunpack.c.l.b16 %v536
        %v684 = vunpack.c.h.b16 %v536
        %v685 = vunpack.c.l.b16 %v537
        %v686 = vunpack.c.h.b16 %v537
        %v687 = vunpack.c.l.b16 %v538
        %v688 = vunpack.c.h.b16 %v538
        %v689 = vunpack.c.l.b16 %v539
        %v690 = vunpack.c.h.b16 %v539
        %v691 = vunpack.c.l.b16 %v540
        %v692 = vunpack.c.h.b16 %v540
        %v693 = vunpack.c.l.b16 %v541
        %v694 = vunpack.c.h.b16 %v541
        %v695 = vunpack.c.l.b16 %v542
        %v696 = vunpack.c.h.b16 %v542
        %v697 = vunpack.c.l.b16 %v543
        %v698 = vunpack.c.h.b16 %v543
        %v699 = vunpack.c.l.b16 %v544
        %v700 = vunpack.c.h.b16 %v544
        %v701 = vpack.c.b16 %v607, %v605
        %v702 = vpack.c.b16 %v608, %v606
        %v703 = vpack.c.b16 %v611, %v609
        %v704 = vpack.c.b16 %v612, %v610
        %v705 = vpack.c.b16 %v615, %v613
        %v706 = vpack.c.b16 %v616, %v614
        %v707 = vpack.c.b16 %v619, %v617
        %v708 = vpack.c.b16 %v620, %v618
        %v709 = vpack.c.b16 %v623, %v621
        %v710 = vpack.c.b16 %v624, %v622
        %v711 = vpack.c.b16 %v627, %v625
        %v712 = vpack.c.b16 %v628, %v626
        %v713 = vpack.c.b16 %v631, %v629
        %v714 = vpack.c.b16 %v632, %v630
        %v715 = vpack.c.b16 %v635, %v633
        %v716 = vpack.c.b16 %v636, %v634
        %v717 = vpack.c.b16 %v639, %v637
        %v718 = vpack.c.b16 %v640, %v638
        %v719 = vpack.c.b16 %v643, %v641
        %v720 = vpack.c.b16 %v644, %v642
        %v721 = vpack.c.b16 %v647, %v645
        %v722 = vpack.c.b16 %v648, %v646
        %v723 = vpack.c.b16 %v651, %v649
        %v724 = vpack.c.b16 %v652, %v650
        %v725 = vpack.c.b16 %v655, %v653
        %v726 = vpack.c.b16 %v656, %v654
        %v727 = vpack.c.b16 %v659, %v657
        %v728 = vpack.c.b16 %v660, %v658
        %v729 = vpack.c.b16 %v663, %v661
        %v730 = vpack.c.b16 %v664, %v662
        %v731 = vpack.c.b16 %v667, %v665
        %v732 = vpack.c.b16 %v668, %v666
        %v733 = vpack.c.b16 %v671, %v669
        %v734 = vpack.c.b16 %v672, %v670
        %v735 = vpack.c.b16 %v675, %v673
        %v736 = vpack.c.b16 %v676, %v674
        %v737 = vpack.c.b16 %v679, %v677
        %v738 = vpack.c.b16 %v680, %v678
        %v739 = vpack.c.b16 %v683, %v681
        %v740 = vpack.c.b16 %v684, %v682
        %v741 = vpack.c.b16 %v687, %v685
        %v742 = vpack.c.b16 %v688, %v686
        %v743 = vpack.c.b16 %v691, %v689
        %v744 = vpack.c.b16 %v692, %v690
        %v745 = vpack.c.b16 %v695, %v693
        %v746 = vpack.c.b16 %v696, %v694
        %v747 = vpack.c.b16 %v699, %v697
        %v748 = vpack.c.b16 %v700, %v698
        %797 = vmatprep.subr.bf16.mxu0 %v702
        %798 = vmatpush1.bf16.msra.mxu0 %v701
        %799 = vmatprep.subr.bf16.mxu0 %v704
        %800 = vmatpush1.bf16.msra.mxu0 %v703
        %801 = vmatprep.subr.bf16.mxu0 %v706
        %802 = vmatpush1.bf16.msra.mxu0 %v705
        %803 = vmatprep.subr.bf16.mxu0 %v708
        %804 = vmatpush1.bf16.msra.mxu0 %v707
        %805 = vmatprep.subr.bf16.mxu0 %v710
        %806 = vmatpush1.bf16.msra.mxu0 %v709
        %807 = vmatprep.subr.bf16.mxu0 %v712
        %808 = vmatpush1.bf16.msra.mxu0 %v711
        %809 = vmatprep.subr.bf16.mxu0 %v714
        %810 = vmatpush1.bf16.msra.mxu0 %v713
        %811 = vmatprep.subr.bf16.mxu0 %v716
        %812 = vmatpush1.bf16.msra.mxu0 %v715
        %813 = vmatprep.subr.bf16.mxu0 %v718
        %814 = vmatpush1.bf16.msra.mxu0 %v717
        %815 = vmatprep.subr.bf16.mxu0 %v720
        %816 = vmatpush1.bf16.msra.mxu0 %v719
        %817 = vmatprep.subr.bf16.mxu0 %v722
        %818 = vmatpush1.bf16.msra.mxu0 %v721
        %819 = vmatprep.subr.bf16.mxu0 %v724
        %820 = vmatpush1.bf16.msra.mxu0 %v723
        %821 = vmatprep.subr.bf16.mxu0 %v726
        %822 = vmatpush1.bf16.msra.mxu0 %v725
        %823 = vmatprep.subr.bf16.mxu0 %v728
        %824 = vmatpush1.bf16.msra.mxu0 %v727
        %825 = vmatprep.subr.bf16.mxu0 %v730
        %826 = vmatpush1.bf16.msra.mxu0 %v729
        %827 = vmatprep.subr.bf16.mxu0 %v732
        %828 = vmatpush1.bf16.msra.mxu0 %v731
        %829 = vmatprep.mubr.bf16.mxu0 %v495
        %830 = vmatmul.mubr.bf16.gmra.mrb[0].mxu0 %v494
        %v831 = vpop.f32.mrb[0].mxu0
        %v832 = vadd.f32 %v550, %v831
        %v833 = vpop.f32.mrb[0].mxu0
        %v834 = vadd.f32 %v554, %v833
        %v835 = vpop.f32.mrb[0].mxu0
        %v836 = vadd.f32 %v550, %v835
        %v837 = vpop.f32.mrb[0].mxu0
        %v838 = vadd.f32 %v554, %v837
        %839 = vdwg.mxu0
        %840 = vmatprep.subr.bf16.mxu0 %v734
        %841 = vmatpush1.bf16.msra.mxu0 %v733
        %842 = vmatprep.subr.bf16.mxu0 %v736
        %843 = vmatpush1.bf16.msra.mxu0 %v735
        %844 = vmatprep.subr.bf16.mxu0 %v738
        %845 = vmatpush1.bf16.msra.mxu0 %v737
        %846 = vmatprep.subr.bf16.mxu0 %v740
        %847 = vmatpush1.bf16.msra.mxu0 %v739
        %848 = vmatprep.subr.bf16.mxu0 %v742
        %849 = vmatpush1.bf16.msra.mxu0 %v741
        %850 = vmatprep.subr.bf16.mxu0 %v744
        %851 = vmatpush1.bf16.msra.mxu0 %v743
        %852 = vmatprep.subr.bf16.mxu0 %v746
        %853 = vmatpush1.bf16.msra.mxu0 %v745
        %854 = vmatprep.subr.bf16.mxu0 %v748
        %855 = vmatpush1.bf16.msra.mxu0 %v747
        %856 = vmatprep.subr.bf16.mxu0 0
        %857 = vmatpush1.bf16.msra.mxu0 0
        %858 = vmatprep.subr.bf16.mxu0 0
        %859 = vmatpush1.bf16.msra.mxu0 0
        %860 = vmatprep.subr.bf16.mxu0 0
        %861 = vmatpush1.bf16.msra.mxu0 0
        %862 = vmatprep.subr.bf16.mxu0 0
        %863 = vmatpush1.bf16.msra.mxu0 0
        %864 = vmatprep.subr.bf16.mxu0 0
        %865 = vmatpush1.bf16.msra.mxu0 0
        %866 = vmatprep.subr.bf16.mxu0 0
        %867 = vmatpush1.bf16.msra.mxu0 0
        %868 = vmatprep.subr.bf16.mxu0 0
        %869 = vmatpush1.bf16.msra.mxu0 0
        %870 = vmatprep.subr.bf16.mxu0 0
        %871 = vmatpush1.bf16.msra.mxu0 0
        %872 = vmatprep.mubr.bf16.mxu0 0
        %873 = vmatmul.mubr.bf16.gmra.mrb[0].mxu0 %v496
        %v874 = vpop.f32.mrb[0].mxu0
        %v875 = vadd.f32 %v832, %v874
        %v876 = vpop.f32.mrb[0].mxu0
        %v877 = vadd.f32 %v834, %v876
        %v878 = vpop.f32.mrb[0].mxu0
        %v879 = vadd.f32 %v836, %v878
        %v880 = vpop.f32.mrb[0].mxu0
        %v881 = vadd.f32 %v838, %v880
        %882 = vdwg.mxu0
        %v883 = vxor.u32 %v875, 2147483648
        %v884 = vxor.u32 %v877, 2147483648
        %v885 = vxor.u32 %v879, 2147483648
        %v886 = vxor.u32 %v881, 2147483648
        %v887 = vmul.f32 %v883, 1.442695
        %v888 = vpow.pop %v887
        %v889 = vmul.f32 %v884, 1.442695
        %v890 = vpow.pop %v889
        %v891 = vmul.f32 %v885, 1.442695
        %v892 = vpow.pop %v891
        %v893 = vmul.f32 %v886, 1.442695
        %v894 = vpow.pop %v893
        %v895 = vadd.f32 %v888, 1.0
        %v896 = vadd.f32 %v890, 1.0
        %v897 = vadd.f32 %v892, 1.0
        %v898 = vadd.f32 %v894, 1.0
        %v899 = vrcp.pop %v895
        %v900 = vmul.f32 1.0, %v899
        %v901 = vrcp.pop %v896
        %v902 = vmul.f32 1.0, %v901
        %v903 = vrcp.pop %v897
        %v904 = vmul.f32 1.0, %v903
        %v905 = vrcp.pop %v898
        %v906 = vmul.f32 1.0, %v905
        %v907 = vmul.f32 %v875, %v900
        %v908 = vmul.f32 %v877, %v902
        %v909 = vmul.f32 %v879, %v904
        %v910 = vmul.f32 %v881, %v906
        %v911 = vunpack.c.l.bf16 %v276
        %v912 = vunpack.c.h.bf16 %v276
        %v913 = vunpack.c.l.bf16 %v277
        %v914 = vunpack.c.h.bf16 %v277
        %v915 = vadd.f32 %v907, %v911
        %v916 = vadd.f32 %v908, %v912
        %v917 = vadd.f32 %v909, %v913
        %v918 = vadd.f32 %v910, %v914
        %919 = vst [vmem:[%s272] sm:$0xff] %v915
        %920 = vst [vmem:[%s272 + $0x8] sm:$0xff] %v916
        %921 = vst [vmem:[%s272 + $0x10] sm:$0xff] %v917
        %922 = vst [vmem:[%s272 + $0x18] sm:$0xff] %v918
        %s923 = sand.u32 %s141, 1
        %s924 = scalar_lea.sflag [#allocation4], %s923
        %s925 = sand.u32 %s141, 1
        %s926 = smul.addr %s925, 32
        %s927 = scalar_lea.vmem [#allocation8], %s926
        // Predicated region
        $region53: #{tpu_custom_call.1} parent=39 // pred_check
          %p928 = pneg %p151
        $region54: #{tpu_custom_call.1} parent=39 // pred_check_branch
          %930 = sbr.rel (%p928) target = $region56
        $region55: #{tpu_custom_call.1} parent=39 // pred_region
          %s931 = smul.u32 2, %s23
          %s933 = ssub.s32 512, 512
          %934 = vsyncadd %s924, %s933
          %s935 = smul.addr %s931, 2
          %s936 = smul.addr %s935, 128
          %s937 = scalar_lea.hbm %s5, %s936
          %s938 = sshll.u32 %s927, 4
          %s939 = int_to_ptr.vmem [resolvable:$true] %s938
          %944 = dma.vmem_to_hbm [thread:$0]  %s939, 512, %s937, %s924, 256, 256, 16
        $region56: #{tpu_custom_call.1} parent=39 // pred_fallthru
          _
      $region40: #{tpu_custom_call.1} parent=5 // pred_fallthru
        _
      %p945 = scmp.le.s32.totalorder 2, %s18
      // Predicated region
      $region57: #{tpu_custom_call.1} parent=5 // pred_check
        %p946 = pneg %p945
      $region58: #{tpu_custom_call.1} parent=5 // pred_check_branch
        %948 = sbr.rel (%p946) target = $region60
      $region59: #{tpu_custom_call.1} parent=5 // pred_region
        %s949 = ssub.s32 %s18, 2
        // Predicated region
        $region61: #{tpu_custom_call.1} parent=59 // pred_check
          %p950 = pneg %p157
        $region62: #{tpu_custom_call.1} parent=59 // pred_check_branch
          %952 = sbr.rel (%p950) target = $region64
        $region63: #{tpu_custom_call.1} parent=59 // pred_region
          %s953 = sand.u32 %s142, 1
          %s954 = scalar_lea.sflag [#allocation4], %s953
          %s955 = sand.u32 %s142, 1
          %s956 = smul.addr %s955, 32
          %s957 = scalar_lea.vmem [#allocation8], %s956
          %958 = dma.done %s954, 512
        $region64: #{tpu_custom_call.1} parent=59 // pred_fallthru
          _
      $region60: #{tpu_custom_call.1} parent=5 // pred_fallthru
        _
    $region6: #{tpu_custom_call.1} parent=1 // loop_footer
      %s22 = sadd.s32 1, %s18
    $region7: #{tpu_custom_call.1} parent=1 // loop_footer_branch
      %17 = sbr.rel target = $region3
    $region8: #{tpu_custom_call.1} parent=1 // loop_exit
      _
    %959 = vsyncpa [#allocation3], 1
    %s960 = scalar_lea.sflag [#allocation3], 1
    %961 = vsyncpa %s960, 1
    %962 = vsyncpa [#allocation6], 1
    %963 = vsyncpa [#allocation4], 1
    %s964 = scalar_lea.sflag [#allocation4], 1
    %965 = vsyncpa %s964, 1

</llo_original>
